<compile_context>
chip_gen: v5e
topology: v5e:2x2
jax: 0.10.0
libtpu: 0.0.40
codegen_flags: <defaults>
</compile_context>

<pallas_src>
import jax
import jax.numpy as jnp
import numpy as np
from jax import lax
from jax.experimental import pallas as pl
from jax.experimental.pallas import tpu as pltpu

LANE = 128
SUBLANE = 8            # f32 sublane granularity (activations are f32 at the HBM boundary)
MAX_TILE_B = 512
_UNROLL_LAYER_LIMIT = 4
_HAS_BUFFERED = hasattr(pl, "Buffered")


def _round_up(n, m):
    return ((n + m - 1) // m) * m


# ---------------------------------------------------------------------------
# Fused multi-layer kernel
# ---------------------------------------------------------------------------

def _make_fused_kernel(n_inputs, n_rest, cp, has_proj, in_splits):
    """Builds the fused Resnet kernel.

    Ref order: x_parts[n_inputs], w0_parts[n_inputs] (bf16), b0 (f32),
               w20 (bf16), [w1s (bf16), b1s (f32), w2s (bf16)] if n_rest>0, out.
    """
    in_total = sum(in_splits)

    def kernel(*refs):
        x_refs = refs[:n_inputs]
        w0_refs = refs[n_inputs:2 * n_inputs]
        b0_ref = refs[2 * n_inputs]
        w20_ref = refs[2 * n_inputs + 1]
        rest = refs[2 * n_inputs + 2:]
        if n_rest > 0:
            w1s_ref, b1s_ref, w2s_ref, o_ref = rest
        else:
            (o_ref,) = rest

        # ----- Layer 0: K-split matmul over (x, *cond) computes the fused
        # [a | gate | (skip-projection)] columns with f32 accumulation. -------
        h = b0_ref[...]
        for xr, wr in zip(x_refs, w0_refs):
            h = h + jnp.dot(xr[...].astype(jnp.bfloat16), wr[...],
                            preferred_element_type=jnp.float32)
        # TODO(synk): torch_ext.AttentionFunction is assumed to be a gated
        # linear activation: split 2*out channels into (a, g), return a*sigmoid(g).
        a = h[:, :cp]                     # 128-aligned slices
        g = h[:, cp:2 * cp]
        act = (a * jax.nn.sigmoid(g)).astype(jnp.bfloat16)
        main = jnp.dot(act, w20_ref[...], preferred_element_type=jnp.float32)

        if has_proj:
            skip = h[:, 2 * cp:3 * cp]
        elif n_inputs == 1 and in_total == cp:
            skip = x_refs[0][...].astype(jnp.float32)
        else:
            # Identity skip with multiple / narrow inputs: build the padded
            # [tile_b, cp] skip in f32 (exact, stays in VMEM).
            parts = [xr[...].astype(jnp.float32) for xr in x_refs]
            if in_total < cp:
                parts.append(jnp.zeros((parts[0].shape[0], cp - in_total), jnp.float32))
            skip = jnp.concatenate(parts, axis=1)
        y = main + skip

        # ----- Layers 1..L-1: identity skip, all [cp -> cp] -------------------
        def layer(l, y):
            h = jnp.dot(y.astype(jnp.bfloat16), w1s_ref[l],
                        preferred_element_type=jnp.float32) + b1s_ref[l]
            a = h[:, :cp]
            g = h[:, cp:]
            act = (a * jax.nn.sigmoid(g)).astype(jnp.bfloat16)
            return jnp.dot(act, w2s_ref[l], preferred_element_type=jnp.float32) + y

        if n_rest > 0:
            if n_rest <= _UNROLL_LAYER_LIMIT:
                for l in range(n_rest):        # small stack: static unroll
                    y = layer(l, y)
            else:
                y = lax.fori_loop(0, n_rest, layer, y)   # deep stack: bound live ranges

        o_ref[...] = y.astype(o_ref.dtype)

    return kernel


# ---------------------------------------------------------------------------
# Parameter construction (deterministic, mimics nn.Linear default init bounds)
# ---------------------------------------------------------------------------

def _init_linear(key, fan_in, fan_out, bias=True):
    bound = 1.0 / np.sqrt(fan_in)
    kw, kb = jax.random.split(key)
    w = jax.random.uniform(kw, (fan_in, fan_out), jnp.float32, -bound, bound)
    if bias:
        b = jax.random.uniform(kb, (1, fan_out), jnp.float32, -bound, bound)
        return w, b
    return w, None


def init_resnet_params(key, in_channels, out_channels, n_layers, in_channels_cond=0):
    in_ch = in_channels + in_channels_cond
    params = []
    for _ in range(n_layers):
        key, k1, k2, k3 = jax.random.split(key, 4)
        w1, b1 = _init_linear(k1, in_ch, 2 * out_channels, bias=True)
        w2, _ = _init_linear(k2, out_channels, out_channels, bias=False)
        p = {"w1": w1, "b1": b1, "w2": w2}
        if in_ch != out_channels:
            ws, bs = _init_linear(k3, in_ch, out_channels, bias=True)
            p["ws"] = ws
            p["bs"] = bs
        params.append(p)
        in_ch = out_channels
    return params


# ---------------------------------------------------------------------------
# Pack raw per-layer params into the padded / fused / bf16 layout
# ---------------------------------------------------------------------------

def pack_resnet_params(params, in_splits, out_channels, weight_dtype=jnp.bfloat16):
    """in_splits: per-input feature widths, in concat order (x first, then conds)."""
    cp = _round_up(out_channels, LANE)
    in_total = sum(in_splits)
    oc = out_channels

    def padw(w, rows, cols):
        return jnp.pad(w, ((0, rows - w.shape[0]), (0, cols - w.shape[1])))

    p0 = params[0]
    has_proj = "ws" in p0
    w1a, w1g = p0["w1"][:, :oc], p0["w1"][:, oc:]
    b1a, b1g = p0["b1"][:, :oc], p0["b1"][:, oc:]
    wcols = [padw(w1a, in_total, cp), padw(w1g, in_total, cp)]
    bcols = [padw(b1a, 1, cp), padw(b1g, 1, cp)]
    if has_proj:
        wcols.append(padw(p0["ws"], in_total, cp))
        bcols.append(padw(p0["bs"], 1, cp))
    w0_full = jnp.concatenate(wcols, axis=1)                  # [in_total, (2|3)*cp]

    # K-split along the input parts so x / cond tensors are passed separately.
    w0_parts, r = [], 0
    for f in in_splits:
        w0_parts.append(w0_full[r:r + f].astype(weight_dtype))
        r += f

    packed = {
        "w0_parts": w0_parts,                                   # list of [f_i, (2|3)*cp] bf16
        "b0": jnp.concatenate(bcols, axis=1).astype(jnp.float32),  # [1, (2|3)*cp] f32
        "w20": padw(p0["w2"], cp, cp).astype(weight_dtype),        # [cp, cp] bf16
        "has_proj": has_proj,
        "cp": cp,
        "out_ch": oc,
        "in_splits": tuple(in_splits),
        "n_rest": len(params) - 1,
    }
    if packed["n_rest"] > 0:
        w1s, b1s, w2s = [], [], []
        for p in params[1:]:
            assert "ws" not in p, "layers after the first must have identity skip"
            wa, wg = p["w1"][:, :oc], p["w1"][:, oc:]
            ba, bg = p["b1"][:, :oc], p["b1"][:, oc:]
            w1s.append(jnp.concatenate([padw(wa, cp, cp), padw(wg, cp, cp)], axis=1))
            b1s.append(jnp.concatenate([padw(ba, 1, cp), padw(bg, 1, cp)], axis=1))
            w2s.append(padw(p["w2"], cp, cp))
        packed["w1s"] = jnp.stack(w1s).astype(weight_dtype)      # [L-1, cp, 2cp] bf16
        packed["b1s"] = jnp.stack(b1s).astype(jnp.float32)       # [L-1, 1, 2cp]  f32
        packed["w2s"] = jnp.stack(w2s).astype(weight_dtype)      # [L-1, cp, cp]  bf16
    return packed


# ---------------------------------------------------------------------------
# Tiling / VMEM heuristics
# ---------------------------------------------------------------------------

def _choose_tile_b(B):
    b_rounded = _round_up(B, SUBLANE)
    n_tiles = pl.cdiv(b_rounded, MAX_TILE_B)
    if b_rounded >= 2 * SUBLANE:
        n_tiles = max(n_tiles, 2)        # >= 2 tiles so "parallel" can use both v7x TCs
    return _round_up(pl.cdiv(B, n_tiles), SUBLANE)


def _vmem_limit_bytes(packed, tile_b):
    cp, n_rest = packed["cp"], packed["n_rest"]
    wbytes = sum(int(w.size) * w.dtype.itemsize for w in packed["w0_parts"])
    wbytes += int(packed["b0"].size) * 4
    wbytes += int(packed["w20"].size) * packed["w20"].dtype.itemsize
    if n_rest > 0:
        wbytes += (int(packed["w1s"].size) + int(packed["w2s"].size)) * packed["w1s"].dtype.itemsize
        wbytes += int(packed["b1s"].size) * 4
    io = 2 * tile_b * (sum(packed["in_splits"]) + cp) * 4     # double-buffered x tiles + out tile
    tmp = 8 * tile_b * cp * 4                                 # h / act / y temporaries (margin)
    need = int(1.25 * (wbytes + io + tmp))
    return int(min(max(need, 16 * 1024 * 1024), 96 * 1024 * 1024))


def _weight_spec(shape, single_buffer):
    zeros = (0,) * len(shape)
    index_map = lambda b: zeros          # stationary across the batch grid
    if single_buffer and _HAS_BUFFERED:
        return pl.BlockSpec(shape, index_map, pipeline_mode=pl.Buffered(1))
    return pl.BlockSpec(shape, index_map)


# ---------------------------------------------------------------------------
# Resnet forward: single fused pallas_call over batch tiles
# ---------------------------------------------------------------------------

def resnet_apply(x, packed, *additional_input):
    inputs = (x,) + tuple(additional_input)
    in_splits = packed["in_splits"]
    assert tuple(a.shape[1] for a in inputs) == in_splits
    B = x.shape[0]
    cp, n_rest, has_proj = packed["cp"], packed["n_rest"], packed["has_proj"]
    out_ch = packed["out_ch"]
    n_in = len(inputs)

    tile_b = _choose_tile_b(B)
    b_pad = _round_up(B, tile_b)
    if b_pad != B:   # pad only when needed (pad is always < one tile)
        inputs = tuple(jnp.pad(a, ((0, b_pad - B), (0, 0))) for a in inputs)

    w0_cols = packed["w0_parts"][0].shape[1]
    args = list(inputs) + list(packed["w0_parts"]) + [packed["b0"], packed["w20"]]
    if n_rest > 0:
        args += [packed["w1s"], packed["b1s"], packed["w2s"]]

    kernel = _make_fused_kernel(n_in, n_rest, cp, has_proj, in_splits)
    vmem_limit = _vmem_limit_bytes(packed, tile_b)

    def build(single_buffer_weights):
        in_specs = [pl.BlockSpec((tile_b, f), lambda b: (b, 0)) for f in in_splits]
        in_specs += [_weight_spec((f, w0_cols), single_buffer_weights) for f in in_splits]
        in_specs += [_weight_spec((1, w0_cols), single_buffer_weights),
                     _weight_spec((cp, cp), single_buffer_weights)]
        if n_rest > 0:
            in_specs += [_weight_spec((n_rest, cp, 2 * cp), single_buffer_weights),
                         _weight_spec((n_rest, 1, 2 * cp), single_buffer_weights),
                         _weight_spec((n_rest, cp, cp), single_buffer_weights)]
        return pl.pallas_call(
            kernel,
            out_shape=jax.ShapeDtypeStruct((b_pad, cp), x.dtype),
            grid=(b_pad // tile_b,),
            in_specs=in_specs,
            out_specs=pl.BlockSpec((tile_b, cp), lambda b: (b, 0)),
            compiler_params=pltpu.CompilerParams(
                dimension_semantics=("parallel",),
                vmem_limit_bytes=vmem_limit),
        )

    try:
        out_padded = build(True)(*args)
    except Exception:
        # Fallback for toolchains without single-buffer pipeline_mode support.
        out_padded = build(False)(*args)
    return out_padded[:B, :out_ch]


def resnet_reference(x, params, *additional_input):
    """Pure-JAX f32 reference mirroring the PyTorch forward semantics."""
    x = jnp.concatenate((x,) + additional_input, axis=1)
    for p in params:
        h = x @ p["w1"] + p["b1"]
        c = p["w2"].shape[1]
        act = h[:, :c] * jax.nn.sigmoid(h[:, c:])
        main = act @ p["w2"]
        skip = (x @ p["ws"] + p["bs"]) if "ws" in p else x
        x = main + skip
    return x


if __name__ == "__main__":
    key = jax.random.PRNGKey(0)
    k_x, k_c, k_p, k_x2, k_c2, k_p2 = jax.random.split(key, 6)

    # Config 1: projection skip on layer 0, small statically-unrolled stack.
    batch, in_ch, cond_ch, out_ch, n_layers = 8, 6, 2, 32, 3
    x = jax.random.normal(k_x, (batch, in_ch), jnp.float32)
    cond = jax.random.normal(k_c, (batch, cond_ch), jnp.float32)
    params = init_resnet_params(k_p, in_ch, out_ch, n_layers, in_channels_cond=cond_ch)
    packed = pack_resnet_params(params, (in_ch, cond_ch), out_ch)
    out = jax.block_until_ready(resnet_apply(x, packed, cond))
    ref = resnet_reference(x, params, cond)
    assert out.shape == (batch, out_ch)
    # bf16 weights/activations on the MXU -> loosened tolerance vs f32 reference
    np.testing.assert_allclose(np.asarray(out), np.asarray(ref), rtol=5e-2, atol=5e-2)

    # Config 2: identity skip on layer 0 (in + cond == out), deeper stack
    # (exercises the fori_loop layer path, batch padding and 2-tile grid).
    batch2, in_ch2, cond_ch2, out_ch2, n_layers2 = 24, 24, 8, 32, 6
    x2 = jax.random.normal(k_x2, (batch2, in_ch2), jnp.float32)
    cond2 = jax.random.normal(k_c2, (batch2, cond_ch2), jnp.float32)
    params2 = init_resnet_params(k_p2, in_ch2, out_ch2, n_layers2, in_channels_cond=cond_ch2)
    packed2 = pack_resnet_params(params2, (in_ch2, cond_ch2), out_ch2)
    out2 = jax.block_until_ready(resnet_apply(x2, packed2, cond2))
    ref2 = resnet_reference(x2, params2, cond2)
    assert out2.shape == (batch2, out_ch2)
    np.testing.assert_allclose(np.asarray(out2), np.asarray(ref2), rtol=5e-2, atol=5e-2)

    print("KERNEL_OK")
</pallas_src>

<mosaic_0001>
module attributes {stable_mosaic.version = 11 : i64} {
  func.func @kernel(%arg0: i32, %arg1: memref<8x6xf32, #tpu.memory_space<vmem>>, %arg2: memref<8x2xf32, #tpu.memory_space<vmem>>, %arg3: memref<6x384xbf16, #tpu.memory_space<vmem>>, %arg4: memref<2x384xbf16, #tpu.memory_space<vmem>>, %arg5: memref<1x384xf32, #tpu.memory_space<vmem>>, %arg6: memref<128x128xbf16, #tpu.memory_space<vmem>>, %arg7: memref<2x128x256xbf16, #tpu.memory_space<vmem>>, %arg8: memref<2x1x256xf32, #tpu.memory_space<vmem>>, %arg9: memref<2x128x128xbf16, #tpu.memory_space<vmem>>, %arg10: memref<8x128xf32, #tpu.memory_space<vmem>>) attributes {dimension_semantics = [#tpu.dimension_semantics<parallel>], iteration_bounds = array<i64: 1>, scalar_prefetch = 0 : i64, scratch_operands = 0 : i64, tpu.core_type = #tpu.core_type<tc>, window_params = [{transform_indices = @transform_0, window_bounds = array<i64: 8, 6>}, {transform_indices = @transform_1, window_bounds = array<i64: 8, 2>}, {pipeline_mode = #tpu.pipeline_mode<synchronous>, transform_indices = @transform_2, window_bounds = array<i64: 6, 384>}, {pipeline_mode = #tpu.pipeline_mode<synchronous>, transform_indices = @transform_3, window_bounds = array<i64: 2, 384>}, {pipeline_mode = #tpu.pipeline_mode<synchronous>, transform_indices = @transform_4, window_bounds = array<i64: 1, 384>}, {pipeline_mode = #tpu.pipeline_mode<synchronous>, transform_indices = @transform_5, window_bounds = array<i64: 128, 128>}, {pipeline_mode = #tpu.pipeline_mode<synchronous>, transform_indices = @transform_6, window_bounds = array<i64: 2, 128, 256>}, {pipeline_mode = #tpu.pipeline_mode<synchronous>, transform_indices = @transform_7, window_bounds = array<i64: 2, 1, 256>}, {pipeline_mode = #tpu.pipeline_mode<synchronous>, transform_indices = @transform_8, window_bounds = array<i64: 2, 128, 128>}, {transform_indices = @transform_9, window_bounds = array<i64: 8, 128>}]} {
    %c0 = arith.constant 0 : index
    %c0_0 = arith.constant 0 : index
    %0 = vector.load %arg5[%c0, %c0_0] : memref<1x384xf32, #tpu.memory_space<vmem>>, vector<1x384xf32>
    %c0_1 = arith.constant 0 : index
    %c0_2 = arith.constant 0 : index
    %1 = vector.load %arg1[%c0_1, %c0_2] : memref<8x6xf32, #tpu.memory_space<vmem>>, vector<8x6xf32>
    %2 = arith.truncf %1 : vector<8x6xf32> to vector<8x6xbf16>
    %c0_3 = arith.constant 0 : index
    %c0_4 = arith.constant 0 : index
    %3 = vector.load %arg3[%c0_3, %c0_4] : memref<6x384xbf16, #tpu.memory_space<vmem>>, vector<6x384xbf16>
    %cst = arith.constant dense<0.000000e+00> : vector<8x384xf32>
    %4 = tpu.matmul %2, %3, %cst {dimension_numbers = #tpu.dot_dimension_numbers<[1], [0], [0], [1], [0, 0, 1, 1], [], []>} : vector<8x6xbf16>, vector<6x384xbf16>, vector<8x384xf32> -> vector<8x384xf32>
    %5 = vector.broadcast %0 : vector<1x384xf32> to vector<8x384xf32>
    %6 = arith.addf %5, %4 : vector<8x384xf32>
    %c0_5 = arith.constant 0 : index
    %c0_6 = arith.constant 0 : index
    %7 = vector.load %arg2[%c0_5, %c0_6] : memref<8x2xf32, #tpu.memory_space<vmem>>, vector<8x2xf32>
    %8 = arith.truncf %7 : vector<8x2xf32> to vector<8x2xbf16>
    %c0_7 = arith.constant 0 : index
    %c0_8 = arith.constant 0 : index
    %9 = vector.load %arg4[%c0_7, %c0_8] : memref<2x384xbf16, #tpu.memory_space<vmem>>, vector<2x384xbf16>
    %cst_9 = arith.constant dense<0.000000e+00> : vector<8x384xf32>
    %10 = tpu.matmul %8, %9, %cst_9 {dimension_numbers = #tpu.dot_dimension_numbers<[1], [0], [0], [1], [0, 0, 1, 1], [], []>} : vector<8x2xbf16>, vector<2x384xbf16>, vector<8x384xf32> -> vector<8x384xf32>
    %11 = arith.addf %6, %10 : vector<8x384xf32>
    %12 = vector.extract_strided_slice %11 {offsets = [0, 0], sizes = [8, 128], strides = [1, 1]} : vector<8x384xf32> to vector<8x128xf32>
    %13 = vector.extract_strided_slice %11 {offsets = [0, 128], sizes = [8, 128], strides = [1, 1]} : vector<8x384xf32> to vector<8x128xf32>
    %14 = arith.negf %13 : vector<8x128xf32>
    %15 = math.exp %14 : vector<8x128xf32>
    %cst_10 = arith.constant 1.000000e+00 : f32
    %16 = vector.broadcast %cst_10 : f32 to vector<8x128xf32>
    %17 = arith.addf %16, %15 : vector<8x128xf32>
    %18 = arith.divf %16, %17 : vector<8x128xf32>
    %19 = arith.mulf %12, %18 : vector<8x128xf32>
    %20 = arith.truncf %19 : vector<8x128xf32> to vector<8x128xbf16>
    %c0_11 = arith.constant 0 : index
    %c0_12 = arith.constant 0 : index
    %21 = vector.load %arg6[%c0_11, %c0_12] : memref<128x128xbf16, #tpu.memory_space<vmem>>, vector<128x128xbf16>
    %cst_13 = arith.constant dense<0.000000e+00> : vector<8x128xf32>
    %22 = tpu.matmul %20, %21, %cst_13 {dimension_numbers = #tpu.dot_dimension_numbers<[1], [0], [0], [1], [0, 0, 1, 1], [], []>} : vector<8x128xbf16>, vector<128x128xbf16>, vector<8x128xf32> -> vector<8x128xf32>
    %23 = vector.extract_strided_slice %11 {offsets = [0, 256], sizes = [8, 128], strides = [1, 1]} : vector<8x384xf32> to vector<8x128xf32>
    %24 = arith.addf %22, %23 : vector<8x128xf32>
    %25 = arith.truncf %24 : vector<8x128xf32> to vector<8x128xbf16>
    %c0_14 = arith.constant 0 : index
    %c0_15 = arith.constant 0 : index
    %c0_16 = arith.constant 0 : index
    %26 = vector.load %arg7[%c0_14, %c0_15, %c0_16] : memref<2x128x256xbf16, #tpu.memory_space<vmem>>, vector<1x128x256xbf16>
    %27 = vector.shape_cast %26 : vector<1x128x256xbf16> to vector<128x256xbf16>
    %cst_17 = arith.constant dense<0.000000e+00> : vector<8x256xf32>
    %28 = tpu.matmul %25, %27, %cst_17 {dimension_numbers = #tpu.dot_dimension_numbers<[1], [0], [0], [1], [0, 0, 1, 1], [], []>} : vector<8x128xbf16>, vector<128x256xbf16>, vector<8x256xf32> -> vector<8x256xf32>
    %c0_18 = arith.constant 0 : index
    %c0_19 = arith.constant 0 : index
    %c0_20 = arith.constant 0 : index
    %29 = vector.load %arg8[%c0_18, %c0_19, %c0_20] : memref<2x1x256xf32, #tpu.memory_space<vmem>>, vector<1x1x256xf32>
    %30 = vector.shape_cast %29 : vector<1x1x256xf32> to vector<1x256xf32>
    %31 = vector.broadcast %30 : vector<1x256xf32> to vector<8x256xf32>
    %32 = arith.addf %28, %31 : vector<8x256xf32>
    %33 = vector.extract_strided_slice %32 {offsets = [0, 0], sizes = [8, 128], strides = [1, 1]} : vector<8x256xf32> to vector<8x128xf32>
    %34 = vector.extract_strided_slice %32 {offsets = [0, 128], sizes = [8, 128], strides = [1, 1]} : vector<8x256xf32> to vector<8x128xf32>
    %35 = arith.negf %34 : vector<8x128xf32>
    %36 = math.exp %35 : vector<8x128xf32>
    %cst_21 = arith.constant 1.000000e+00 : f32
    %37 = vector.broadcast %cst_21 : f32 to vector<8x128xf32>
    %38 = arith.addf %37, %36 : vector<8x128xf32>
    %39 = arith.divf %37, %38 : vector<8x128xf32>
    %40 = arith.mulf %33, %39 : vector<8x128xf32>
    %41 = arith.truncf %40 : vector<8x128xf32> to vector<8x128xbf16>
    %c0_22 = arith.constant 0 : index
    %c0_23 = arith.constant 0 : index
    %c0_24 = arith.constant 0 : index
    %42 = vector.load %arg9[%c0_22, %c0_23, %c0_24] : memref<2x128x128xbf16, #tpu.memory_space<vmem>>, vector<1x128x128xbf16>
    %43 = vector.shape_cast %42 : vector<1x128x128xbf16> to vector<128x128xbf16>
    %cst_25 = arith.constant dense<0.000000e+00> : vector<8x128xf32>
    %44 = tpu.matmul %41, %43, %cst_25 {dimension_numbers = #tpu.dot_dimension_numbers<[1], [0], [0], [1], [0, 0, 1, 1], [], []>} : vector<8x128xbf16>, vector<128x128xbf16>, vector<8x128xf32> -> vector<8x128xf32>
    %45 = arith.addf %44, %24 : vector<8x128xf32>
    %46 = arith.truncf %45 : vector<8x128xf32> to vector<8x128xbf16>
    %c1 = arith.constant 1 : index
    %c0_26 = arith.constant 0 : index
    %c0_27 = arith.constant 0 : index
    %47 = vector.load %arg7[%c1, %c0_26, %c0_27] : memref<2x128x256xbf16, #tpu.memory_space<vmem>>, vector<1x128x256xbf16>
    %48 = vector.shape_cast %47 : vector<1x128x256xbf16> to vector<128x256xbf16>
    %cst_28 = arith.constant dense<0.000000e+00> : vector<8x256xf32>
    %49 = tpu.matmul %46, %48, %cst_28 {dimension_numbers = #tpu.dot_dimension_numbers<[1], [0], [0], [1], [0, 0, 1, 1], [], []>} : vector<8x128xbf16>, vector<128x256xbf16>, vector<8x256xf32> -> vector<8x256xf32>
    %c1_29 = arith.constant 1 : index
    %c0_30 = arith.constant 0 : index
    %c0_31 = arith.constant 0 : index
    %50 = vector.load %arg8[%c1_29, %c0_30, %c0_31] : memref<2x1x256xf32, #tpu.memory_space<vmem>>, vector<1x1x256xf32>
    %51 = vector.shape_cast %50 : vector<1x1x256xf32> to vector<1x256xf32>
    %52 = vector.broadcast %51 : vector<1x256xf32> to vector<8x256xf32>
    %53 = arith.addf %49, %52 : vector<8x256xf32>
    %54 = vector.extract_strided_slice %53 {offsets = [0, 0], sizes = [8, 128], strides = [1, 1]} : vector<8x256xf32> to vector<8x128xf32>
    %55 = vector.extract_strided_slice %53 {offsets = [0, 128], sizes = [8, 128], strides = [1, 1]} : vector<8x256xf32> to vector<8x128xf32>
    %56 = arith.negf %55 : vector<8x128xf32>
    %57 = math.exp %56 : vector<8x128xf32>
    %cst_32 = arith.constant 1.000000e+00 : f32
    %58 = vector.broadcast %cst_32 : f32 to vector<8x128xf32>
    %59 = arith.addf %58, %57 : vector<8x128xf32>
    %60 = arith.divf %58, %59 : vector<8x128xf32>
    %61 = arith.mulf %54, %60 : vector<8x128xf32>
    %62 = arith.truncf %61 : vector<8x128xf32> to vector<8x128xbf16>
    %c1_33 = arith.constant 1 : index
    %c0_34 = arith.constant 0 : index
    %c0_35 = arith.constant 0 : index
    %63 = vector.load %arg9[%c1_33, %c0_34, %c0_35] : memref<2x128x128xbf16, #tpu.memory_space<vmem>>, vector<1x128x128xbf16>
    %64 = vector.shape_cast %63 : vector<1x128x128xbf16> to vector<128x128xbf16>
    %cst_36 = arith.constant dense<0.000000e+00> : vector<8x128xf32>
    %65 = tpu.matmul %62, %64, %cst_36 {dimension_numbers = #tpu.dot_dimension_numbers<[1], [0], [0], [1], [0, 0, 1, 1], [], []>} : vector<8x128xbf16>, vector<128x128xbf16>, vector<8x128xf32> -> vector<8x128xf32>
    %66 = arith.addf %65, %45 : vector<8x128xf32>
    %c0_37 = arith.constant 0 : index
    %c0_38 = arith.constant 0 : index
    %67 = vector.load %arg10[%c0_37, %c0_38] : memref<8x128xf32, #tpu.memory_space<vmem>>, vector<8x128xf32>
    tpu.vector_store %arg10[%c0_37, %c0_38], %66 {strides = array<i32>} : memref<8x128xf32, #tpu.memory_space<vmem>>, vector<8x128xf32>,
    return
  }
  func.func @transform_0(%arg0: i32) -> (i32, i32) {
    %c0_i32 = arith.constant 0 : i32
    %c0_i32_0 = arith.constant 0 : i32
    return %arg0, %c0_i32 : i32, i32
  }
  func.func @transform_1(%arg0: i32) -> (i32, i32) {
    %c0_i32 = arith.constant 0 : i32
    %c0_i32_0 = arith.constant 0 : i32
    return %arg0, %c0_i32 : i32, i32
  }
  func.func @transform_2(%arg0: i32) -> (i32, i32) {
    %c0_i32 = arith.constant 0 : i32
    %c0_i32_0 = arith.constant 0 : i32
    %c0_i32_1 = arith.constant 0 : i32
    return %c0_i32, %c0_i32_0 : i32, i32
  }
  func.func @transform_3(%arg0: i32) -> (i32, i32) {
    %c0_i32 = arith.constant 0 : i32
    %c0_i32_0 = arith.constant 0 : i32
    %c0_i32_1 = arith.constant 0 : i32
    return %c0_i32, %c0_i32_0 : i32, i32
  }
  func.func @transform_4(%arg0: i32) -> (i32, i32) {
    %c0_i32 = arith.constant 0 : i32
    %c0_i32_0 = arith.constant 0 : i32
    %c0_i32_1 = arith.constant 0 : i32
    return %c0_i32, %c0_i32_0 : i32, i32
  }
  func.func @transform_5(%arg0: i32) -> (i32, i32) {
    %c0_i32 = arith.constant 0 : i32
    %c0_i32_0 = arith.constant 0 : i32
    %c0_i32_1 = arith.constant 0 : i32
    return %c0_i32, %c0_i32_0 : i32, i32
  }
  func.func @transform_6(%arg0: i32) -> (i32, i32, i32) {
    %c0_i32 = arith.constant 0 : i32
    %c0_i32_0 = arith.constant 0 : i32
    %c0_i32_1 = arith.constant 0 : i32
    %c0_i32_2 = arith.constant 0 : i32
    return %c0_i32, %c0_i32_0, %c0_i32_1 : i32, i32, i32
  }
  func.func @transform_7(%arg0: i32) -> (i32, i32, i32) {
    %c0_i32 = arith.constant 0 : i32
    %c0_i32_0 = arith.constant 0 : i32
    %c0_i32_1 = arith.constant 0 : i32
    %c0_i32_2 = arith.constant 0 : i32
    return %c0_i32, %c0_i32_0, %c0_i32_1 : i32, i32, i32
  }
  func.func @transform_8(%arg0: i32) -> (i32, i32, i32) {
    %c0_i32 = arith.constant 0 : i32
    %c0_i32_0 = arith.constant 0 : i32
    %c0_i32_1 = arith.constant 0 : i32
    %c0_i32_2 = arith.constant 0 : i32
    return %c0_i32, %c0_i32_0, %c0_i32_1 : i32, i32, i32
  }
  func.func @transform_9(%arg0: i32) -> (i32, i32) {
    %c0_i32 = arith.constant 0 : i32
    %c0_i32_0 = arith.constant 0 : i32
    return %arg0, %c0_i32 : i32, i32
  }
}

module attributes {stable_mosaic.version = 11 : i64} {
  func.func @kernel(%arg0: i32, %arg1: memref<8x6xf32, #tpu.memory_space<vmem>>, %arg2: memref<8x2xf32, #tpu.memory_space<vmem>>, %arg3: memref<6x384xbf16, #tpu.memory_space<vmem>>, %arg4: memref<2x384xbf16, #tpu.memory_space<vmem>>, %arg5: memref<1x384xf32, #tpu.memory_space<vmem>>, %arg6: memref<128x128xbf16, #tpu.memory_space<vmem>>, %arg7: memref<2x128x256xbf16, #tpu.memory_space<vmem>>, %arg8: memref<2x1x256xf32, #tpu.memory_space<vmem>>, %arg9: memref<2x128x128xbf16, #tpu.memory_space<vmem>>, %arg10: memref<8x128xf32, #tpu.memory_space<vmem>>) attributes {dimension_semantics = [#tpu.dimension_semantics<parallel>], iteration_bounds = array<i64: 1>, scalar_prefetch = 0 : i64, scratch_operands = 0 : i64, tpu.core_type = #tpu.core_type<tc>, window_params = [{transform_indices = @transform_0, window_bounds = array<i64: 8, 6>}, {transform_indices = @transform_1, window_bounds = array<i64: 8, 2>}, {pipeline_mode = #tpu.pipeline_mode<synchronous>, transform_indices = @transform_2, window_bounds = array<i64: 6, 384>}, {pipeline_mode = #tpu.pipeline_mode<synchronous>, transform_indices = @transform_3, window_bounds = array<i64: 2, 384>}, {pipeline_mode = #tpu.pipeline_mode<synchronous>, transform_indices = @transform_4, window_bounds = array<i64: 1, 384>}, {pipeline_mode = #tpu.pipeline_mode<synchronous>, transform_indices = @transform_5, window_bounds = array<i64: 128, 128>}, {pipeline_mode = #tpu.pipeline_mode<synchronous>, transform_indices = @transform_6, window_bounds = array<i64: 2, 128, 256>}, {pipeline_mode = #tpu.pipeline_mode<synchronous>, transform_indices = @transform_7, window_bounds = array<i64: 2, 1, 256>}, {pipeline_mode = #tpu.pipeline_mode<synchronous>, transform_indices = @transform_8, window_bounds = array<i64: 2, 128, 128>}, {transform_indices = @transform_9, window_bounds = array<i64: 8, 128>}]} {
    %c0 = arith.constant 0 : index
    %c0_0 = arith.constant 0 : index
    %0 = vector.load %arg5[%c0, %c0_0] : memref<1x384xf32, #tpu.memory_space<vmem>>, vector<1x384xf32>
    %c0_1 = arith.constant 0 : index
    %c0_2 = arith.constant 0 : index
    %1 = vector.load %arg1[%c0_1, %c0_2] : memref<8x6xf32, #tpu.memory_space<vmem>>, vector<8x6xf32>
    %2 = arith.truncf %1 : vector<8x6xf32> to vector<8x6xbf16>
    %c0_3 = arith.constant 0 : index
    %c0_4 = arith.constant 0 : index
    %3 = vector.load %arg3[%c0_3, %c0_4] : memref<6x384xbf16, #tpu.memory_space<vmem>>, vector<6x384xbf16>
    %cst = arith.constant dense<0.000000e+00> : vector<8x384xf32>
    %4 = tpu.matmul %2, %3, %cst {dimension_numbers = #tpu.dot_dimension_numbers<[1], [0], [0], [1], [0, 0, 1, 1], [], []>} : vector<8x6xbf16>, vector<6x384xbf16>, vector<8x384xf32> -> vector<8x384xf32>
    %5 = vector.broadcast %0 : vector<1x384xf32> to vector<8x384xf32>
    %6 = arith.addf %5, %4 : vector<8x384xf32>
    %c0_5 = arith.constant 0 : index
    %c0_6 = arith.constant 0 : index
    %7 = vector.load %arg2[%c0_5, %c0_6] : memref<8x2xf32, #tpu.memory_space<vmem>>, vector<8x2xf32>
    %8 = arith.truncf %7 : vector<8x2xf32> to vector<8x2xbf16>
    %c0_7 = arith.constant 0 : index
    %c0_8 = arith.constant 0 : index
    %9 = vector.load %arg4[%c0_7, %c0_8] : memref<2x384xbf16, #tpu.memory_space<vmem>>, vector<2x384xbf16>
    %cst_9 = arith.constant dense<0.000000e+00> : vector<8x384xf32>
    %10 = tpu.matmul %8, %9, %cst_9 {dimension_numbers = #tpu.dot_dimension_numbers<[1], [0], [0], [1], [0, 0, 1, 1], [], []>} : vector<8x2xbf16>, vector<2x384xbf16>, vector<8x384xf32> -> vector<8x384xf32>
    %11 = arith.addf %6, %10 : vector<8x384xf32>
    %12 = vector.extract_strided_slice %11 {offsets = [0, 0], sizes = [8, 128], strides = [1, 1]} : vector<8x384xf32> to vector<8x128xf32>
    %13 = vector.extract_strided_slice %11 {offsets = [0, 128], sizes = [8, 128], strides = [1, 1]} : vector<8x384xf32> to vector<8x128xf32>
    %14 = arith.negf %13 : vector<8x128xf32>
    %15 = math.exp %14 : vector<8x128xf32>
    %cst_10 = arith.constant 1.000000e+00 : f32
    %16 = vector.broadcast %cst_10 : f32 to vector<8x128xf32>
    %17 = arith.addf %16, %15 : vector<8x128xf32>
    %18 = arith.divf %16, %17 : vector<8x128xf32>
    %19 = arith.mulf %12, %18 : vector<8x128xf32>
    %20 = arith.truncf %19 : vector<8x128xf32> to vector<8x128xbf16>
    %c0_11 = arith.constant 0 : index
    %c0_12 = arith.constant 0 : index
    %21 = vector.load %arg6[%c0_11, %c0_12] : memref<128x128xbf16, #tpu.memory_space<vmem>>, vector<128x128xbf16>
    %cst_13 = arith.constant dense<0.000000e+00> : vector<8x128xf32>
    %22 = tpu.matmul %20, %21, %cst_13 {dimension_numbers = #tpu.dot_dimension_numbers<[1], [0], [0], [1], [0, 0, 1, 1], [], []>} : vector<8x128xbf16>, vector<128x128xbf16>, vector<8x128xf32> -> vector<8x128xf32>
    %23 = vector.extract_strided_slice %11 {offsets = [0, 256], sizes = [8, 128], strides = [1, 1]} : vector<8x384xf32> to vector<8x128xf32>
    %24 = arith.addf %22, %23 : vector<8x128xf32>
    %25 = arith.truncf %24 : vector<8x128xf32> to vector<8x128xbf16>
    %c0_14 = arith.constant 0 : index
    %c0_15 = arith.constant 0 : index
    %c0_16 = arith.constant 0 : index
    %26 = vector.load %arg7[%c0_14, %c0_15, %c0_16] : memref<2x128x256xbf16, #tpu.memory_space<vmem>>, vector<1x128x256xbf16>
    %27 = vector.shape_cast %26 : vector<1x128x256xbf16> to vector<128x256xbf16>
    %cst_17 = arith.constant dense<0.000000e+00> : vector<8x256xf32>
    %28 = tpu.matmul %25, %27, %cst_17 {dimension_numbers = #tpu.dot_dimension_numbers<[1], [0], [0], [1], [0, 0, 1, 1], [], []>} : vector<8x128xbf16>, vector<128x256xbf16>, vector<8x256xf32> -> vector<8x256xf32>
    %c0_18 = arith.constant 0 : index
    %c0_19 = arith.constant 0 : index
    %c0_20 = arith.constant 0 : index
    %29 = vector.load %arg8[%c0_18, %c0_19, %c0_20] : memref<2x1x256xf32, #tpu.memory_space<vmem>>, vector<1x1x256xf32>
    %30 = vector.shape_cast %29 : vector<1x1x256xf32> to vector<1x256xf32>
    %31 = vector.broadcast %30 : vector<1x256xf32> to vector<8x256xf32>
    %32 = arith.addf %28, %31 : vector<8x256xf32>
    %33 = vector.extract_strided_slice %32 {offsets = [0, 0], sizes = [8, 128], strides = [1, 1]} : vector<8x256xf32> to vector<8x128xf32>
    %34 = vector.extract_strided_slice %32 {offsets = [0, 128], sizes = [8, 128], strides = [1, 1]} : vector<8x256xf32> to vector<8x128xf32>
    %35 = arith.negf %34 : vector<8x128xf32>
    %36 = math.exp %35 : vector<8x128xf32>
    %cst_21 = arith.constant 1.000000e+00 : f32
    %37 = vector.broadcast %cst_21 : f32 to vector<8x128xf32>
    %38 = arith.addf %37, %36 : vector<8x128xf32>
    %39 = arith.divf %37, %38 : vector<8x128xf32>
    %40 = arith.mulf %33, %39 : vector<8x128xf32>
    %41 = arith.truncf %40 : vector<8x128xf32> to vector<8x128xbf16>
    %c0_22 = arith.constant 0 : index
    %c0_23 = arith.constant 0 : index
    %c0_24 = arith.constant 0 : index
    %42 = vector.load %arg9[%c0_22, %c0_23, %c0_24] : memref<2x128x128xbf16, #tpu.memory_space<vmem>>, vector<1x128x128xbf16>
    %43 = vector.shape_cast %42 : vector<1x128x128xbf16> to vector<128x128xbf16>
    %cst_25 = arith.constant dense<0.000000e+00> : vector<8x128xf32>
    %44 = tpu.matmul %41, %43, %cst_25 {dimension_numbers = #tpu.dot_dimension_numbers<[1], [0], [0], [1], [0, 0, 1, 1], [], []>} : vector<8x128xbf16>, vector<128x128xbf16>, vector<8x128xf32> -> vector<8x128xf32>
    %45 = arith.addf %44, %24 : vector<8x128xf32>
    %46 = arith.truncf %45 : vector<8x128xf32> to vector<8x128xbf16>
    %c1 = arith.constant 1 : index
    %c0_26 = arith.constant 0 : index
    %c0_27 = arith.constant 0 : index
    %47 = vector.load %arg7[%c1, %c0_26, %c0_27] : memref<2x128x256xbf16, #tpu.memory_space<vmem>>, vector<1x128x256xbf16>
    %48 = vector.shape_cast %47 : vector<1x128x256xbf16> to vector<128x256xbf16>
    %cst_28 = arith.constant dense<0.000000e+00> : vector<8x256xf32>
    %49 = tpu.matmul %46, %48, %cst_28 {dimension_numbers = #tpu.dot_dimension_numbers<[1], [0], [0], [1], [0, 0, 1, 1], [], []>} : vector<8x128xbf16>, vector<128x256xbf16>, vector<8x256xf32> -> vector<8x256xf32>
    %c1_29 = arith.constant 1 : index
    %c0_30 = arith.constant 0 : index
    %c0_31 = arith.constant 0 : index
    %50 = vector.load %arg8[%c1_29, %c0_30, %c0_31] : memref<2x1x256xf32, #tpu.memory_space<vmem>>, vector<1x1x256xf32>
    %51 = vector.shape_cast %50 : vector<1x1x256xf32> to vector<1x256xf32>
    %52 = vector.broadcast %51 : vector<1x256xf32> to vector<8x256xf32>
    %53 = arith.addf %49, %52 : vector<8x256xf32>
    %54 = vector.extract_strided_slice %53 {offsets = [0, 0], sizes = [8, 128], strides = [1, 1]} : vector<8x256xf32> to vector<8x128xf32>
    %55 = vector.extract_strided_slice %53 {offsets = [0, 128], sizes = [8, 128], strides = [1, 1]} : vector<8x256xf32> to vector<8x128xf32>
    %56 = arith.negf %55 : vector<8x128xf32>
    %57 = math.exp %56 : vector<8x128xf32>
    %cst_32 = arith.constant 1.000000e+00 : f32
    %58 = vector.broadcast %cst_32 : f32 to vector<8x128xf32>
    %59 = arith.addf %58, %57 : vector<8x128xf32>
    %60 = arith.divf %58, %59 : vector<8x128xf32>
    %61 = arith.mulf %54, %60 : vector<8x128xf32>
    %62 = arith.truncf %61 : vector<8x128xf32> to vector<8x128xbf16>
    %c1_33 = arith.constant 1 : index
    %c0_34 = arith.constant 0 : index
    %c0_35 = arith.constant 0 : index
    %63 = vector.load %arg9[%c1_33, %c0_34, %c0_35] : memref<2x128x128xbf16, #tpu.memory_space<vmem>>, vector<1x128x128xbf16>
    %64 = vector.shape_cast %63 : vector<1x128x128xbf16> to vector<128x128xbf16>
    %cst_36 = arith.constant dense<0.000000e+00> : vector<8x128xf32>
    %65 = tpu.matmul %62, %64, %cst_36 {dimension_numbers = #tpu.dot_dimension_numbers<[1], [0], [0], [1], [0, 0, 1, 1], [], []>} : vector<8x128xbf16>, vector<128x128xbf16>, vector<8x128xf32> -> vector<8x128xf32>
    %66 = arith.addf %65, %45 : vector<8x128xf32>
    %c0_37 = arith.constant 0 : index
    %c0_38 = arith.constant 0 : index
    %67 = vector.load %arg10[%c0_37, %c0_38] : memref<8x128xf32, #tpu.memory_space<vmem>>, vector<8x128xf32>
    tpu.vector_store %arg10[%c0_37, %c0_38], %66 {strides = array<i32>} : memref<8x128xf32, #tpu.memory_space<vmem>>, vector<8x128xf32>,
    return
  }
  func.func @transform_0(%arg0: i32) -> (i32, i32) {
    %c0_i32 = arith.constant 0 : i32
    %c0_i32_0 = arith.constant 0 : i32
    return %arg0, %c0_i32 : i32, i32
  }
  func.func @transform_1(%arg0: i32) -> (i32, i32) {
    %c0_i32 = arith.constant 0 : i32
    %c0_i32_0 = arith.constant 0 : i32
    return %arg0, %c0_i32 : i32, i32
  }
  func.func @transform_2(%arg0: i32) -> (i32, i32) {
    %c0_i32 = arith.constant 0 : i32
    %c0_i32_0 = arith.constant 0 : i32
    %c0_i32_1 = arith.constant 0 : i32
    return %c0_i32, %c0_i32_0 : i32, i32
  }
  func.func @transform_3(%arg0: i32) -> (i32, i32) {
    %c0_i32 = arith.constant 0 : i32
    %c0_i32_0 = arith.constant 0 : i32
    %c0_i32_1 = arith.constant 0 : i32
    return %c0_i32, %c0_i32_0 : i32, i32
  }
  func.func @transform_4(%arg0: i32) -> (i32, i32) {
    %c0_i32 = arith.constant 0 : i32
    %c0_i32_0 = arith.constant 0 : i32
    %c0_i32_1 = arith.constant 0 : i32
    return %c0_i32, %c0_i32_0 : i32, i32
  }
  func.func @transform_5(%arg0: i32) -> (i32, i32) {
    %c0_i32 = arith.constant 0 : i32
    %c0_i32_0 = arith.constant 0 : i32
    %c0_i32_1 = arith.constant 0 : i32
    return %c0_i32, %c0_i32_0 : i32, i32
  }
  func.func @transform_6(%arg0: i32) -> (i32, i32, i32) {
    %c0_i32 = arith.constant 0 : i32
    %c0_i32_0 = arith.constant 0 : i32
    %c0_i32_1 = arith.constant 0 : i32
    %c0_i32_2 = arith.constant 0 : i32
    return %c0_i32, %c0_i32_0, %c0_i32_1 : i32, i32, i32
  }
  func.func @transform_7(%arg0: i32) -> (i32, i32, i32) {
    %c0_i32 = arith.constant 0 : i32
    %c0_i32_0 = arith.constant 0 : i32
    %c0_i32_1 = arith.constant 0 : i32
    %c0_i32_2 = arith.constant 0 : i32
    return %c0_i32, %c0_i32_0, %c0_i32_1 : i32, i32, i32
  }
  func.func @transform_8(%arg0: i32) -> (i32, i32, i32) {
    %c0_i32 = arith.constant 0 : i32
    %c0_i32_0 = arith.constant 0 : i32
    %c0_i32_1 = arith.constant 0 : i32
    %c0_i32_2 = arith.constant 0 : i32
    return %c0_i32, %c0_i32_0, %c0_i32_1 : i32, i32, i32
  }
  func.func @transform_9(%arg0: i32) -> (i32, i32) {
    %c0_i32 = arith.constant 0 : i32
    %c0_i32_0 = arith.constant 0 : i32
    return %arg0, %c0_i32 : i32, i32
  }
}

</mosaic_0001>

<llo_original>
// kernel: tpu_custom_call.1
$region0: #{tpu_custom_call.1}
  #allocation0 [shape = 'u32[]', space=smem, size = 0x4, offset = 0x4, fixed_abs, tag = 'smem constant byte address 0x4 - core index']
  #allocation1 [shape = 'u32[72,128]{1,0:T(1,128)}', space=vmem, size = 0x9000, scoped, tag = 'internal scratch']
  %s0 = inlined_call_operand.vmem [shape: f32[8,6], index: 0, kind: input, shape index: {}]
  %s1 = inlined_call_operand.vmem [shape: f32[8,2], index: 1, kind: input, shape index: {}]
  %s2 = inlined_call_operand.hbm [shape: bf16[6,384], index: 2, kind: input, shape index: {}]
  %s3 = inlined_call_operand.hbm [shape: bf16[2,384], index: 3, kind: input, shape index: {}]
  %s4 = inlined_call_operand.hbm [shape: f32[1,384], index: 4, kind: input, shape index: {}]
  %s5 = inlined_call_operand.hbm [shape: bf16[128,128], index: 5, kind: input, shape index: {}]
  %s6 = inlined_call_operand.hbm [shape: bf16[2,128,256], index: 6, kind: input, shape index: {}]
  %s7 = inlined_call_operand.vmem [shape: f32[2,1,256], index: 7, kind: input, shape index: {}]
  %s8 = inlined_call_operand.hbm [shape: bf16[2,128,128], index: 8, kind: input, shape index: {}]
  %s9 = inlined_call_operand.hbm [shape: f32[8,128], index: 9, kind: output, shape index: {}]
  %s10 = sld [smem:[#allocation0]]
  $region70: #{tpu_custom_call.1} parent=0
    _
  %s12 = ssub.s32 1, %s10
  %s13 = scalar_select 0, %s12, %s10
  $region1: #{tpu_custom_call.1} parent=0
    #allocation2 [shape = 'u8[6144]{0}', space=vmem, size = 0x1800, scoped, tag = 'input window, operand 2, single buffered']
    #allocation3 [shape = 's32[1]{0}', space=sflag, size = 0x4, scoped, tag = 'scoped memory for tpu_custom_call.1']
    #allocation4 [shape = 's32[1]{0}', space=sflag, size = 0x4, scoped, tag = 'scoped memory for tpu_custom_call.1']
    #allocation5 [shape = 'u8[1536]{0}', space=vmem, size = 0x800, scoped, tag = 'input window, operand 3, single buffered']
    #allocation6 [shape = 's32[1]{0}', space=sflag, size = 0x4, scoped, tag = 'scoped memory for tpu_custom_call.1']
    #allocation7 [shape = 'u8[1536]{0}', space=vmem, size = 0x800, scoped, tag = 'input window, operand 4, single buffered']
    #allocation8 [shape = 'u8[32768]{0}', space=vmem, size = 0x8000, scoped, tag = 'input window, operand 5, single buffered']
    #allocation9 [shape = 's32[1]{0}', space=sflag, size = 0x4, scoped, tag = 'scoped memory for tpu_custom_call.1']
    #allocation10 [shape = 'u8[131072]{0}', space=vmem, size = 0x20000, scoped, tag = 'input window, operand 6, single buffered']
    #allocation11 [shape = 'u8[65536]{0}', space=vmem, size = 0x10000, scoped, tag = 'input window, operand 8, single buffered']
    #allocation12 [shape = 's32[1]{0}', space=sflag, size = 0x4, scoped, tag = 'scoped memory for tpu_custom_call.1']
    #allocation13 [shape = 'u8[4096]{0}', space=vmem, size = 0x1000, scoped, tag = 'output window, operand 0, single buffered']
    %14 = vsyncpa [#allocation3], 0
    %15 = vsyncpa [#allocation6], 0
    %16 = vsyncpa [#allocation9], 0
    %17 = vsyncpa [#allocation12], 0
    %18 = vsyncpa [#allocation4], 0
    // Predicated region
    $region2: #{tpu_custom_call.1} parent=1 // pred_check
      _
    $region3: #{tpu_custom_call.1} parent=1 // pred_check_branch
      %20 = sbr.rel (0) target = $region5
    $region4: #{tpu_custom_call.1} parent=1 // pred_region
      _
    $region5: #{tpu_custom_call.1} parent=1 // pred_fallthru
      _
    // Predicated region
    $region6: #{tpu_custom_call.1} parent=1 // pred_check
      _
    $region7: #{tpu_custom_call.1} parent=1 // pred_check_branch
      %22 = sbr.rel (0) target = $region9
    $region8: #{tpu_custom_call.1} parent=1 // pred_region
      _
    $region9: #{tpu_custom_call.1} parent=1 // pred_fallthru
      _
    // Predicated region
    $region10: #{tpu_custom_call.1} parent=1 // pred_check
      _
    $region11: #{tpu_custom_call.1} parent=1 // pred_check_branch
      %24 = sbr.rel (0) target = $region13
    $region12: #{tpu_custom_call.1} parent=1 // pred_region
      %26 = vsyncadd [#allocation3], 0
      %s28 = sshll.u32 %s2, 4
      %s29 = int_to_ptr.hbm [resolvable:$true] %s28
      %s30 = sshll.u32 [#allocation2], 4
      %s31 = int_to_ptr.vmem [resolvable:$true] %s30
      %33 = dma.hbm_to_vmem [thread:$0]  %s29, 192, %s31, [#allocation3]
    $region13: #{tpu_custom_call.1} parent=1 // pred_fallthru
      _
    // Predicated region
    $region14: #{tpu_custom_call.1} parent=1 // pred_check
      _
    $region15: #{tpu_custom_call.1} parent=1 // pred_check_branch
      %35 = sbr.rel (0) target = $region17
    $region16: #{tpu_custom_call.1} parent=1 // pred_region
      %37 = vsyncadd [#allocation6], 0
      %s39 = sshll.u32 %s3, 4
      %s40 = int_to_ptr.hbm [resolvable:$true] %s39
      %s41 = sshll.u32 [#allocation5], 4
      %s42 = int_to_ptr.vmem [resolvable:$true] %s41
      %44 = dma.hbm_to_vmem [thread:$0]  %s40, 48, %s42, [#allocation6]
    $region17: #{tpu_custom_call.1} parent=1 // pred_fallthru
      _
    // Predicated region
    $region18: #{tpu_custom_call.1} parent=1 // pred_check
      _
    $region19: #{tpu_custom_call.1} parent=1 // pred_check_branch
      %46 = sbr.rel (0) target = $region21
    $region20: #{tpu_custom_call.1} parent=1 // pred_region
      %48 = vsyncadd [#allocation6], 0
      %s50 = sshll.u32 %s4, 4
      %s51 = int_to_ptr.hbm [resolvable:$true] %s50
      %s52 = sshll.u32 [#allocation7], 4
      %s53 = int_to_ptr.vmem [resolvable:$true] %s52
      %55 = dma.hbm_to_vmem [thread:$0]  %s51, 48, %s53, [#allocation6]
    $region21: #{tpu_custom_call.1} parent=1 // pred_fallthru
      _
    // Predicated region
    $region22: #{tpu_custom_call.1} parent=1 // pred_check
      _
    $region23: #{tpu_custom_call.1} parent=1 // pred_check_branch
      %57 = sbr.rel (0) target = $region25
    $region24: #{tpu_custom_call.1} parent=1 // pred_region
      %59 = vsyncadd [#allocation9], 0
      %s60 = sshll.u32 %s5, 4
      %s61 = int_to_ptr.hbm [resolvable:$true] %s60
      %s62 = sshll.u32 [#allocation8], 4
      %s63 = int_to_ptr.vmem [resolvable:$true] %s62
      %68 = dma.hbm_to_vmem [thread:$0]  %s61, 1024, %s63, [#allocation9], 64, 64, 4
    $region25: #{tpu_custom_call.1} parent=1 // pred_fallthru
      _
    // Predicated region
    $region26: #{tpu_custom_call.1} parent=1 // pred_check
      _
    $region27: #{tpu_custom_call.1} parent=1 // pred_check_branch
      %70 = sbr.rel (0) target = $region29
    $region28: #{tpu_custom_call.1} parent=1 // pred_region
      %72 = vsyncadd [#allocation9], 0
      %s73 = sshll.u32 %s6, 4
      %s74 = int_to_ptr.hbm [resolvable:$true] %s73
      %s75 = sshll.u32 [#allocation10], 4
      %s76 = int_to_ptr.vmem [resolvable:$true] %s75
      %81 = dma.hbm_to_vmem [thread:$0]  %s74, 4096, %s76, [#allocation9], 128, 128, 8
    $region29: #{tpu_custom_call.1} parent=1 // pred_fallthru
      _
    // Predicated region
    $region30: #{tpu_custom_call.1} parent=1 // pred_check
      _
    $region31: #{tpu_custom_call.1} parent=1 // pred_check_branch
      %83 = sbr.rel (0) target = $region33
    $region32: #{tpu_custom_call.1} parent=1 // pred_region
      _
    $region33: #{tpu_custom_call.1} parent=1 // pred_fallthru
      _
    // Predicated region
    $region34: #{tpu_custom_call.1} parent=1 // pred_check
      _
    $region35: #{tpu_custom_call.1} parent=1 // pred_check_branch
      %85 = sbr.rel (0) target = $region37
    $region36: #{tpu_custom_call.1} parent=1 // pred_region
      %87 = vsyncadd [#allocation12], 0
      %s88 = sshll.u32 %s8, 4
      %s89 = int_to_ptr.hbm [resolvable:$true] %s88
      %s90 = sshll.u32 [#allocation11], 4
      %s91 = int_to_ptr.vmem [resolvable:$true] %s90
      %96 = dma.hbm_to_vmem [thread:$0]  %s89, 2048, %s91, [#allocation12], 64, 64, 4
    $region37: #{tpu_custom_call.1} parent=1 // pred_fallthru
      _
    // Predicated region
    $region38: #{tpu_custom_call.1} parent=1 // pred_check
      _
    $region39: #{tpu_custom_call.1} parent=1 // pred_check_branch
      %98 = sbr.rel (0) target = $region41
    $region40: #{tpu_custom_call.1} parent=1 // pred_region
      %100 = dma.done [#allocation3], 192
    $region41: #{tpu_custom_call.1} parent=1 // pred_fallthru
      _
    // Predicated region
    $region42: #{tpu_custom_call.1} parent=1 // pred_check
      _
    $region43: #{tpu_custom_call.1} parent=1 // pred_check_branch
      %102 = sbr.rel (0) target = $region45
    $region44: #{tpu_custom_call.1} parent=1 // pred_region
      %104 = dma.done [#allocation6], 48
    $region45: #{tpu_custom_call.1} parent=1 // pred_fallthru
      _
    // Predicated region
    $region46: #{tpu_custom_call.1} parent=1 // pred_check
      _
    $region47: #{tpu_custom_call.1} parent=1 // pred_check_branch
      %106 = sbr.rel (0) target = $region49
    $region48: #{tpu_custom_call.1} parent=1 // pred_region
      %108 = dma.done [#allocation6], 48
    $region49: #{tpu_custom_call.1} parent=1 // pred_fallthru
      _
    // Predicated region
    $region50: #{tpu_custom_call.1} parent=1 // pred_check
      _
    $region51: #{tpu_custom_call.1} parent=1 // pred_check_branch
      %110 = sbr.rel (0) target = $region53
    $region52: #{tpu_custom_call.1} parent=1 // pred_region
      %112 = dma.done [#allocation9], 1024
    $region53: #{tpu_custom_call.1} parent=1 // pred_fallthru
      _
    // Predicated region
    $region54: #{tpu_custom_call.1} parent=1 // pred_check
      _
    $region55: #{tpu_custom_call.1} parent=1 // pred_check_branch
      %114 = sbr.rel (0) target = $region57
    $region56: #{tpu_custom_call.1} parent=1 // pred_region
      %116 = dma.done [#allocation9], 4096
    $region57: #{tpu_custom_call.1} parent=1 // pred_fallthru
      _
    // Predicated region
    $region58: #{tpu_custom_call.1} parent=1 // pred_check
      _
    $region59: #{tpu_custom_call.1} parent=1 // pred_check_branch
      %118 = sbr.rel (0) target = $region61
    $region60: #{tpu_custom_call.1} parent=1 // pred_region
      %120 = dma.done [#allocation12], 2048
    $region61: #{tpu_custom_call.1} parent=1 // pred_fallthru
      _
    %v122 = vld [vmem:[#allocation7] sm:$0x7]
    %v123 = vld [vmem:[%s0] sm:$0xff]
    %v124 = vpack.c.bf16 %v123, %v123
    %v125 = vld [vmem:[#allocation2] sm:$0x77]
    %v126 = vld [vmem:[#allocation2 + $0x8] sm:$0x7]
    %v129 = vunpack.c.l.b16 %v125
    %v130 = vunpack.c.h.b16 %v125
    %v131 = vunpack.c.l.b16 %v126
    %v132 = vpack.c.b16 %v129, %v129
    %v133 = vpack.c.b16 %v130, %v130
    %v134 = vpack.c.b16 %v131, %v131
    %vm135 = vcmask 48128
    %v137 = vsel %vm135, %v124, 0
    %vm139 = vcmask 1042432
    %v141 = vsel %vm139, %v132, 0
    %v144 = vsel %vm139, %v133, 0
    %v147 = vsel %vm139, %v134, 0
    %149 = vmatpush.bf16.msra.mxu0 0
    %150 = vmatpush.bf16.msra.mxu0 0
    %151 = vmatpush.bf16.msra.mxu0 0
    %152 = vmatpush.bf16.msra.mxu0 0
    %153 = vmatpush.bf16.msra.mxu0 0
    %154 = vmatpush.bf16.msra.mxu0 0
    %155 = vmatpush.bf16.msra.mxu0 0
    %156 = vmatpush.bf16.msra.mxu0 %v141
    %157 = vmatmul.bf16.gmra.mxu0 %v137
    %v158 = vpop.f32.mrf.mxu0
    %v159 = vadd.f32 0.0, %v158
    %v160 = vpop.f32.mrf.mxu0
    %161 = vdwg.mxu0
    %162 = vmatpush.bf16.msra.mxu0 0
    %163 = vmatpush.bf16.msra.mxu0 0
    %164 = vmatpush.bf16.msra.mxu0 0
    %165 = vmatpush.bf16.msra.mxu0 0
    %166 = vmatpush.bf16.msra.mxu0 0
    %167 = vmatpush.bf16.msra.mxu0 0
    %168 = vmatpush.bf16.msra.mxu0 0
    %169 = vmatpush.bf16.msra.mxu0 %v144
    %170 = vmatmul.bf16.gmra.mxu0 %v137
    %v171 = vpop.f32.mrf.mxu0
    %v172 = vadd.f32 0.0, %v171
    %v173 = vpop.f32.mrf.mxu0
    %174 = vdwg.mxu0
    %175 = vmatpush.bf16.msra.mxu0 0
    %176 = vmatpush.bf16.msra.mxu0 0
    %177 = vmatpush.bf16.msra.mxu0 0
    %178 = vmatpush.bf16.msra.mxu0 0
    %179 = vmatpush.bf16.msra.mxu0 0
    %180 = vmatpush.bf16.msra.mxu0 0
    %181 = vmatpush.bf16.msra.mxu0 0
    %182 = vmatpush.bf16.msra.mxu0 %v147
    %183 = vmatmul.bf16.gmra.mxu0 %v137
    %v184 = vpop.f32.mrf.mxu0
    %v185 = vadd.f32 0.0, %v184
    %v186 = vpop.f32.mrf.mxu0
    %187 = vdwg.mxu0
    %v189 = vperm.slane %v122, 0
    %v190 = vperm.slane %v122, 1
    %v191 = vperm.slane %v122, 2
    %v195 = vadd.f32 %v189, %v159
    %v196 = vadd.f32 %v190, %v172
    %v197 = vadd.f32 %v191, %v185
    %v198 = vld [vmem:[%s1] sm:$0xff]
    %v199 = vpack.c.bf16 %v198, %v198
    %v200 = vld [vmem:[#allocation5] sm:$0x7]
    %202 = vst [vmem:[#allocation1] ss:$9 sm:$0xff] %v200
    %v203 = vld [vmem:[#allocation1] sm:$0xff]
    %v204 = vld [vmem:[#allocation1 + $0x9] sm:$0xff]
    %v205 = vld [vmem:[#allocation1 + $0x12] sm:$0xff]
    %vm206 = vcmask 15360
    %v208 = vsel %vm206, %v199, 0
    %vm210 = vcmask 1040384
    %v211 = vsel %vm210, %v203, 0
    %v213 = vsel %vm210, %v204, 0
    %v215 = vsel %vm210, %v205, 0
    %217 = vmatpush.bf16.msra.mxu0 0
    %218 = vmatpush.bf16.msra.mxu0 0
    %219 = vmatpush.bf16.msra.mxu0 0
    %220 = vmatpush.bf16.msra.mxu0 0
    %221 = vmatpush.bf16.msra.mxu0 0
    %222 = vmatpush.bf16.msra.mxu0 0
    %223 = vmatpush.bf16.msra.mxu0 0
    %224 = vmatpush.bf16.msra.mxu0 %v211
    %225 = vmatmul.bf16.gmra.mxu0 %v208
    %v226 = vpop.f32.mrf.mxu0
    %v227 = vadd.f32 0.0, %v226
    %v228 = vpop.f32.mrf.mxu0
    %229 = vdwg.mxu0
    %230 = vmatpush.bf16.msra.mxu0 0
    %231 = vmatpush.bf16.msra.mxu0 0
    %232 = vmatpush.bf16.msra.mxu0 0
    %233 = vmatpush.bf16.msra.mxu0 0
    %234 = vmatpush.bf16.msra.mxu0 0
    %235 = vmatpush.bf16.msra.mxu0 0
    %236 = vmatpush.bf16.msra.mxu0 0
    %237 = vmatpush.bf16.msra.mxu0 %v213
    %238 = vmatmul.bf16.gmra.mxu0 %v208
    %v239 = vpop.f32.mrf.mxu0
    %v240 = vadd.f32 0.0, %v239
    %v241 = vpop.f32.mrf.mxu0
    %242 = vdwg.mxu0
    %243 = vmatpush.bf16.msra.mxu0 0
    %244 = vmatpush.bf16.msra.mxu0 0
    %245 = vmatpush.bf16.msra.mxu0 0
    %246 = vmatpush.bf16.msra.mxu0 0
    %247 = vmatpush.bf16.msra.mxu0 0
    %248 = vmatpush.bf16.msra.mxu0 0
    %249 = vmatpush.bf16.msra.mxu0 0
    %250 = vmatpush.bf16.msra.mxu0 %v215
    %251 = vmatmul.bf16.gmra.mxu0 %v208
    %v252 = vpop.f32.mrf.mxu0
    %v253 = vadd.f32 0.0, %v252
    %v254 = vpop.f32.mrf.mxu0
    %255 = vdwg.mxu0
    %v256 = vadd.f32 %v195, %v227
    %v257 = vadd.f32 %v196, %v240
    %v258 = vadd.f32 %v197, %v253
    %v259 = vxor.u32 %v257, 2147483648
    %v260 = vmul.f32 %v259, 1.442695
    %v261 = vpow.pop %v260
    %v262 = vadd.f32 %v261, 1.0
    %v263 = vrcp.pop %v262
    %v264 = vmul.f32 %v262, %v263
    %v265 = vsub.f32 1.0, %v264
    %v266 = vmul.f32 %v263, %v265
    %v267 = vadd.f32 %v263, %v266
    %vm268 = vweird.f32 %v262
    %vm269 = vweird.f32 %v263
    %vm270 = vmor %vm268, %vm269
    %v271 = vsel %vm270, %v263, %v267
    %v272 = vand.u32 2147483647, %v262
    %vm273 = vcmp.eq.f32.partialorder %v272, 8.507059e+37
    %v274 = vand.u32 %v262, 2147483648
    %v275 = vor.u32 1.1754944e-38, %v274
    %v276 = vsel %vm273, %v275, %v271
    %v277 = vmul.f32 1.0, %v276
    %v278 = vmul.f32 %v256, %v277
    %v279 = vpack.c.bf16 %v278, %v278
    %v280 = vld [vmem:[#allocation8] sm:$0xf]
    %v281 = vld [vmem:[#allocation8 + $0x4] sm:$0xf]
    %v282 = vld [vmem:[#allocation8 + $0x8] sm:$0xf]
    %v283 = vld [vmem:[#allocation8 + $0xc] sm:$0xf]
    %v284 = vld [vmem:[#allocation8 + $0x10] sm:$0xf]
    %v285 = vld [vmem:[#allocation8 + $0x14] sm:$0xf]
    %v286 = vld [vmem:[#allocation8 + $0x18] sm:$0xf]
    %v287 = vld [vmem:[#allocation8 + $0x1c] sm:$0xf]
    %v288 = vld [vmem:[#allocation8 + $0x20] sm:$0xf]
    %v289 = vld [vmem:[#allocation8 + $0x24] sm:$0xf]
    %v290 = vld [vmem:[#allocation8 + $0x28] sm:$0xf]
    %v291 = vld [vmem:[#allocation8 + $0x2c] sm:$0xf]
    %v292 = vld [vmem:[#allocation8 + $0x30] sm:$0xf]
    %v293 = vld [vmem:[#allocation8 + $0x34] sm:$0xf]
    %v294 = vld [vmem:[#allocation8 + $0x38] sm:$0xf]
    %v295 = vld [vmem:[#allocation8 + $0x3c] sm:$0xf]
    %v312 = vunpack.c.l.b16 %v280
    %v313 = vunpack.c.l.b16 %v281
    %v314 = vunpack.c.l.b16 %v282
    %v315 = vunpack.c.l.b16 %v283
    %v316 = vunpack.c.l.b16 %v284
    %v317 = vunpack.c.l.b16 %v285
    %v318 = vunpack.c.l.b16 %v286
    %v319 = vunpack.c.l.b16 %v287
    %v320 = vunpack.c.l.b16 %v288
    %v321 = vunpack.c.l.b16 %v289
    %v322 = vunpack.c.l.b16 %v290
    %v323 = vunpack.c.l.b16 %v291
    %v324 = vunpack.c.l.b16 %v292
    %v325 = vunpack.c.l.b16 %v293
    %v326 = vunpack.c.l.b16 %v294
    %v327 = vunpack.c.l.b16 %v295
    %v328 = vpack.c.b16 %v313, %v312
    %v329 = vpack.c.b16 %v315, %v314
    %v330 = vpack.c.b16 %v317, %v316
    %v331 = vpack.c.b16 %v319, %v318
    %v332 = vpack.c.b16 %v321, %v320
    %v333 = vpack.c.b16 %v323, %v322
    %v334 = vpack.c.b16 %v325, %v324
    %v335 = vpack.c.b16 %v327, %v326
    %344 = vmatpush.bf16.msra.mxu0 %v335
    %345 = vmatpush.bf16.msra.mxu0 %v334
    %346 = vmatpush.bf16.msra.mxu0 %v333
    %347 = vmatpush.bf16.msra.mxu0 %v332
    %348 = vmatpush.bf16.msra.mxu0 %v331
    %349 = vmatpush.bf16.msra.mxu0 %v330
    %350 = vmatpush.bf16.msra.mxu0 %v329
    %351 = vmatpush.bf16.msra.mxu0 %v328
    %352 = vmatmul.bf16.gmra.mxu0 %v279
    %v353 = vpop.f32.mrf.mxu0
    %v354 = vadd.f32 %v258, %v353
    %v355 = vpop.f32.mrf.mxu0
    %356 = vdwg.mxu0
    %v357 = vpack.c.bf16 %v354, %v354
    %v358 = vld [vmem:[#allocation10] sm:$0xff]
    %v359 = vld [vmem:[#allocation10 + $0x8] sm:$0xff]
    %v360 = vld [vmem:[#allocation10 + $0x10] sm:$0xff]
    %v361 = vld [vmem:[#allocation10 + $0x18] sm:$0xff]
    %v362 = vld [vmem:[#allocation10 + $0x20] sm:$0xff]
    %v363 = vld [vmem:[#allocation10 + $0x28] sm:$0xff]
    %v364 = vld [vmem:[#allocation10 + $0x30] sm:$0xff]
    %v365 = vld [vmem:[#allocation10 + $0x38] sm:$0xff]
    %v366 = vld [vmem:[#allocation10 + $0x40] sm:$0xff]
    %v367 = vld [vmem:[#allocation10 + $0x48] sm:$0xff]
    %v368 = vld [vmem:[#allocation10 + $0x50] sm:$0xff]
    %v369 = vld [vmem:[#allocation10 + $0x58] sm:$0xff]
    %v370 = vld [vmem:[#allocation10 + $0x60] sm:$0xff]
    %v371 = vld [vmem:[#allocation10 + $0x68] sm:$0xff]
    %v372 = vld [vmem:[#allocation10 + $0x70] sm:$0xff]
    %v373 = vld [vmem:[#allocation10 + $0x78] sm:$0xff]
    %v374 = vld [vmem:[%s7] sm:$0x3]
    %v376 = vperm.slane %v374, 0
    %v377 = vperm.slane %v374, 1
    %v396 = vunpack.c.l.b16 %v358
    %v397 = vunpack.c.h.b16 %v358
    %v398 = vunpack.c.l.b16 %v359
    %v399 = vunpack.c.h.b16 %v359
    %v400 = vunpack.c.l.b16 %v360
    %v401 = vunpack.c.h.b16 %v360
    %v402 = vunpack.c.l.b16 %v361
    %v403 = vunpack.c.h.b16 %v361
    %v404 = vunpack.c.l.b16 %v362
    %v405 = vunpack.c.h.b16 %v362
    %v406 = vunpack.c.l.b16 %v363
    %v407 = vunpack.c.h.b16 %v363
    %v408 = vunpack.c.l.b16 %v364
    %v409 = vunpack.c.h.b16 %v364
    %v410 = vunpack.c.l.b16 %v365
    %v411 = vunpack.c.h.b16 %v365
    %v412 = vunpack.c.l.b16 %v366
    %v413 = vunpack.c.h.b16 %v366
    %v414 = vunpack.c.l.b16 %v367
    %v415 = vunpack.c.h.b16 %v367
    %v416 = vunpack.c.l.b16 %v368
    %v417 = vunpack.c.h.b16 %v368
    %v418 = vunpack.c.l.b16 %v369
    %v419 = vunpack.c.h.b16 %v369
    %v420 = vunpack.c.l.b16 %v370
    %v421 = vunpack.c.h.b16 %v370
    %v422 = vunpack.c.l.b16 %v371
    %v423 = vunpack.c.h.b16 %v371
    %v424 = vunpack.c.l.b16 %v372
    %v425 = vunpack.c.h.b16 %v372
    %v426 = vunpack.c.l.b16 %v373
    %v427 = vunpack.c.h.b16 %v373
    %v428 = vpack.c.b16 %v398, %v396
    %v429 = vpack.c.b16 %v399, %v397
    %v430 = vpack.c.b16 %v402, %v400
    %v431 = vpack.c.b16 %v403, %v401
    %v432 = vpack.c.b16 %v406, %v404
    %v433 = vpack.c.b16 %v407, %v405
    %v434 = vpack.c.b16 %v410, %v408
    %v435 = vpack.c.b16 %v411, %v409
    %v436 = vpack.c.b16 %v414, %v412
    %v437 = vpack.c.b16 %v415, %v413
    %v438 = vpack.c.b16 %v418, %v416
    %v439 = vpack.c.b16 %v419, %v417
    %v440 = vpack.c.b16 %v422, %v420
    %v441 = vpack.c.b16 %v423, %v421
    %v442 = vpack.c.b16 %v426, %v424
    %v443 = vpack.c.b16 %v427, %v425
    %460 = vmatpush.bf16.msra.mxu0 %v442
    %461 = vmatpush.bf16.msra.mxu0 %v440
    %462 = vmatpush.bf16.msra.mxu0 %v438
    %463 = vmatpush.bf16.msra.mxu0 %v436
    %464 = vmatpush.bf16.msra.mxu0 %v434
    %465 = vmatpush.bf16.msra.mxu0 %v432
    %466 = vmatpush.bf16.msra.mxu0 %v430
    %467 = vmatpush.bf16.msra.mxu0 %v428
    %468 = vmatmul.bf16.gmra.mxu0 %v357
    %v469 = vpop.f32.mrf.mxu0
    %v470 = vadd.f32 %v376, %v469
    %v471 = vpop.f32.mrf.mxu0
    %472 = vdwg.mxu0
    %473 = vmatpush.bf16.msra.mxu0 %v443
    %474 = vmatpush.bf16.msra.mxu0 %v441
    %475 = vmatpush.bf16.msra.mxu0 %v439
    %476 = vmatpush.bf16.msra.mxu0 %v437
    %477 = vmatpush.bf16.msra.mxu0 %v435
    %478 = vmatpush.bf16.msra.mxu0 %v433
    %479 = vmatpush.bf16.msra.mxu0 %v431
    %480 = vmatpush.bf16.msra.mxu0 %v429
    %481 = vmatmul.bf16.gmra.mxu0 %v357
    %v482 = vpop.f32.mrf.mxu0
    %v483 = vadd.f32 %v377, %v482
    %v484 = vpop.f32.mrf.mxu0
    %485 = vdwg.mxu0
    %v486 = vxor.u32 %v483, 2147483648
    %v487 = vmul.f32 %v486, 1.442695
    %v488 = vpow.pop %v487
    %v489 = vadd.f32 %v488, 1.0
    %v490 = vrcp.pop %v489
    %v491 = vmul.f32 %v489, %v490
    %v492 = vsub.f32 1.0, %v491
    %v493 = vmul.f32 %v490, %v492
    %v494 = vadd.f32 %v490, %v493
    %vm495 = vweird.f32 %v489
    %vm496 = vweird.f32 %v490
    %vm497 = vmor %vm495, %vm496
    %v498 = vsel %vm497, %v490, %v494
    %v499 = vand.u32 2147483647, %v489
    %vm500 = vcmp.eq.f32.partialorder %v499, 8.507059e+37
    %v501 = vand.u32 %v489, 2147483648
    %v502 = vor.u32 1.1754944e-38, %v501
    %v503 = vsel %vm500, %v502, %v498
    %v504 = vmul.f32 1.0, %v503
    %v505 = vmul.f32 %v470, %v504
    %v506 = vpack.c.bf16 %v505, %v505
    %v507 = vld [vmem:[#allocation11] sm:$0xf]
    %v508 = vld [vmem:[#allocation11 + $0x4] sm:$0xf]
    %v509 = vld [vmem:[#allocation11 + $0x8] sm:$0xf]
    %v510 = vld [vmem:[#allocation11 + $0xc] sm:$0xf]
    %v511 = vld [vmem:[#allocation11 + $0x10] sm:$0xf]
    %v512 = vld [vmem:[#allocation11 + $0x14] sm:$0xf]
    %v513 = vld [vmem:[#allocation11 + $0x18] sm:$0xf]
    %v514 = vld [vmem:[#allocation11 + $0x1c] sm:$0xf]
    %v515 = vld [vmem:[#allocation11 + $0x20] sm:$0xf]
    %v516 = vld [vmem:[#allocation11 + $0x24] sm:$0xf]
    %v517 = vld [vmem:[#allocation11 + $0x28] sm:$0xf]
    %v518 = vld [vmem:[#allocation11 + $0x2c] sm:$0xf]
    %v519 = vld [vmem:[#allocation11 + $0x30] sm:$0xf]
    %v520 = vld [vmem:[#allocation11 + $0x34] sm:$0xf]
    %v521 = vld [vmem:[#allocation11 + $0x38] sm:$0xf]
    %v522 = vld [vmem:[#allocation11 + $0x3c] sm:$0xf]
    %v539 = vunpack.c.l.b16 %v507
    %v540 = vunpack.c.l.b16 %v508
    %v541 = vunpack.c.l.b16 %v509
    %v542 = vunpack.c.l.b16 %v510
    %v543 = vunpack.c.l.b16 %v511
    %v544 = vunpack.c.l.b16 %v512
    %v545 = vunpack.c.l.b16 %v513
    %v546 = vunpack.c.l.b16 %v514
    %v547 = vunpack.c.l.b16 %v515
    %v548 = vunpack.c.l.b16 %v516
    %v549 = vunpack.c.l.b16 %v517
    %v550 = vunpack.c.l.b16 %v518
    %v551 = vunpack.c.l.b16 %v519
    %v552 = vunpack.c.l.b16 %v520
    %v553 = vunpack.c.l.b16 %v521
    %v554 = vunpack.c.l.b16 %v522
    %v555 = vpack.c.b16 %v540, %v539
    %v556 = vpack.c.b16 %v542, %v541
    %v557 = vpack.c.b16 %v544, %v543
    %v558 = vpack.c.b16 %v546, %v545
    %v559 = vpack.c.b16 %v548, %v547
    %v560 = vpack.c.b16 %v550, %v549
    %v561 = vpack.c.b16 %v552, %v551
    %v562 = vpack.c.b16 %v554, %v553
    %571 = vmatpush.bf16.msra.mxu0 %v562
    %572 = vmatpush.bf16.msra.mxu0 %v561
    %573 = vmatpush.bf16.msra.mxu0 %v560
    %574 = vmatpush.bf16.msra.mxu0 %v559
    %575 = vmatpush.bf16.msra.mxu0 %v558
    %576 = vmatpush.bf16.msra.mxu0 %v557
    %577 = vmatpush.bf16.msra.mxu0 %v556
    %578 = vmatpush.bf16.msra.mxu0 %v555
    %579 = vmatmul.bf16.gmra.mxu0 %v506
    %v580 = vpop.f32.mrf.mxu0
    %v581 = vadd.f32 %v354, %v580
    %v582 = vpop.f32.mrf.mxu0
    %583 = vdwg.mxu0
    %v584 = vpack.c.bf16 %v581, %v581
    %s585 = scalar_lea.vmem [#allocation10], 128
    %v586 = vld [vmem:[%s585] sm:$0xff]
    %v587 = vld [vmem:[%s585 + $0x8] sm:$0xff]
    %v588 = vld [vmem:[%s585 + $0x10] sm:$0xff]
    %v589 = vld [vmem:[%s585 + $0x18] sm:$0xff]
    %v590 = vld [vmem:[%s585 + $0x20] sm:$0xff]
    %v591 = vld [vmem:[%s585 + $0x28] sm:$0xff]
    %v592 = vld [vmem:[%s585 + $0x30] sm:$0xff]
    %v593 = vld [vmem:[%s585 + $0x38] sm:$0xff]
    %v594 = vld [vmem:[%s585 + $0x40] sm:$0xff]
    %v595 = vld [vmem:[%s585 + $0x48] sm:$0xff]
    %v596 = vld [vmem:[%s585 + $0x50] sm:$0xff]
    %v597 = vld [vmem:[%s585 + $0x58] sm:$0xff]
    %v598 = vld [vmem:[%s585 + $0x60] sm:$0xff]
    %v599 = vld [vmem:[%s585 + $0x68] sm:$0xff]
    %v600 = vld [vmem:[%s585 + $0x70] sm:$0xff]
    %v601 = vld [vmem:[%s585 + $0x78] sm:$0xff]
    %s602 = scalar_lea.vmem %s7, 2
    %v603 = vld [vmem:[%s602] sm:$0x3]
    %v605 = vperm.slane %v603, 0
    %v606 = vperm.slane %v603, 1
    %v625 = vunpack.c.l.b16 %v586
    %v626 = vunpack.c.h.b16 %v586
    %v627 = vunpack.c.l.b16 %v587
    %v628 = vunpack.c.h.b16 %v587
    %v629 = vunpack.c.l.b16 %v588
    %v630 = vunpack.c.h.b16 %v588
    %v631 = vunpack.c.l.b16 %v589
    %v632 = vunpack.c.h.b16 %v589
    %v633 = vunpack.c.l.b16 %v590
    %v634 = vunpack.c.h.b16 %v590
    %v635 = vunpack.c.l.b16 %v591
    %v636 = vunpack.c.h.b16 %v591
    %v637 = vunpack.c.l.b16 %v592
    %v638 = vunpack.c.h.b16 %v592
    %v639 = vunpack.c.l.b16 %v593
    %v640 = vunpack.c.h.b16 %v593
    %v641 = vunpack.c.l.b16 %v594
    %v642 = vunpack.c.h.b16 %v594
    %v643 = vunpack.c.l.b16 %v595
    %v644 = vunpack.c.h.b16 %v595
    %v645 = vunpack.c.l.b16 %v596
    %v646 = vunpack.c.h.b16 %v596
    %v647 = vunpack.c.l.b16 %v597
    %v648 = vunpack.c.h.b16 %v597
    %v649 = vunpack.c.l.b16 %v598
    %v650 = vunpack.c.h.b16 %v598
    %v651 = vunpack.c.l.b16 %v599
    %v652 = vunpack.c.h.b16 %v599
    %v653 = vunpack.c.l.b16 %v600
    %v654 = vunpack.c.h.b16 %v600
    %v655 = vunpack.c.l.b16 %v601
    %v656 = vunpack.c.h.b16 %v601
    %v657 = vpack.c.b16 %v627, %v625
    %v658 = vpack.c.b16 %v628, %v626
    %v659 = vpack.c.b16 %v631, %v629
    %v660 = vpack.c.b16 %v632, %v630
    %v661 = vpack.c.b16 %v635, %v633
    %v662 = vpack.c.b16 %v636, %v634
    %v663 = vpack.c.b16 %v639, %v637
    %v664 = vpack.c.b16 %v640, %v638
    %v665 = vpack.c.b16 %v643, %v641
    %v666 = vpack.c.b16 %v644, %v642
    %v667 = vpack.c.b16 %v647, %v645
    %v668 = vpack.c.b16 %v648, %v646
    %v669 = vpack.c.b16 %v651, %v649
    %v670 = vpack.c.b16 %v652, %v650
    %v671 = vpack.c.b16 %v655, %v653
    %v672 = vpack.c.b16 %v656, %v654
    %689 = vmatpush.bf16.msra.mxu0 %v671
    %690 = vmatpush.bf16.msra.mxu0 %v669
    %691 = vmatpush.bf16.msra.mxu0 %v667
    %692 = vmatpush.bf16.msra.mxu0 %v665
    %693 = vmatpush.bf16.msra.mxu0 %v663
    %694 = vmatpush.bf16.msra.mxu0 %v661
    %695 = vmatpush.bf16.msra.mxu0 %v659
    %696 = vmatpush.bf16.msra.mxu0 %v657
    %697 = vmatmul.bf16.gmra.mxu0 %v584
    %v698 = vpop.f32.mrf.mxu0
    %v699 = vadd.f32 %v605, %v698
    %v700 = vpop.f32.mrf.mxu0
    %701 = vdwg.mxu0
    %702 = vmatpush.bf16.msra.mxu0 %v672
    %703 = vmatpush.bf16.msra.mxu0 %v670
    %704 = vmatpush.bf16.msra.mxu0 %v668
    %705 = vmatpush.bf16.msra.mxu0 %v666
    %706 = vmatpush.bf16.msra.mxu0 %v664
    %707 = vmatpush.bf16.msra.mxu0 %v662
    %708 = vmatpush.bf16.msra.mxu0 %v660
    %709 = vmatpush.bf16.msra.mxu0 %v658
    %710 = vmatmul.bf16.gmra.mxu0 %v584
    %v711 = vpop.f32.mrf.mxu0
    %v712 = vadd.f32 %v606, %v711
    %v713 = vpop.f32.mrf.mxu0
    %714 = vdwg.mxu0
    %v715 = vxor.u32 %v712, 2147483648
    %v716 = vmul.f32 %v715, 1.442695
    %v717 = vpow.pop %v716
    %v718 = vadd.f32 %v717, 1.0
    %v719 = vrcp.pop %v718
    %v720 = vmul.f32 %v718, %v719
    %v721 = vsub.f32 1.0, %v720
    %v722 = vmul.f32 %v719, %v721
    %v723 = vadd.f32 %v719, %v722
    %vm724 = vweird.f32 %v718
    %vm725 = vweird.f32 %v719
    %vm726 = vmor %vm724, %vm725
    %v727 = vsel %vm726, %v719, %v723
    %v728 = vand.u32 2147483647, %v718
    %vm729 = vcmp.eq.f32.partialorder %v728, 8.507059e+37
    %v730 = vand.u32 %v718, 2147483648
    %v731 = vor.u32 1.1754944e-38, %v730
    %v732 = vsel %vm729, %v731, %v727
    %v733 = vmul.f32 1.0, %v732
    %v734 = vmul.f32 %v699, %v733
    %v735 = vpack.c.bf16 %v734, %v734
    %s736 = scalar_lea.vmem [#allocation11], 64
    %v737 = vld [vmem:[%s736] sm:$0xf]
    %v738 = vld [vmem:[%s736 + $0x4] sm:$0xf]
    %v739 = vld [vmem:[%s736 + $0x8] sm:$0xf]
    %v740 = vld [vmem:[%s736 + $0xc] sm:$0xf]
    %v741 = vld [vmem:[%s736 + $0x10] sm:$0xf]
    %v742 = vld [vmem:[%s736 + $0x14] sm:$0xf]
    %v743 = vld [vmem:[%s736 + $0x18] sm:$0xf]
    %v744 = vld [vmem:[%s736 + $0x1c] sm:$0xf]
    %v745 = vld [vmem:[%s736 + $0x20] sm:$0xf]
    %v746 = vld [vmem:[%s736 + $0x24] sm:$0xf]
    %v747 = vld [vmem:[%s736 + $0x28] sm:$0xf]
    %v748 = vld [vmem:[%s736 + $0x2c] sm:$0xf]
    %v749 = vld [vmem:[%s736 + $0x30] sm:$0xf]
    %v750 = vld [vmem:[%s736 + $0x34] sm:$0xf]
    %v751 = vld [vmem:[%s736 + $0x38] sm:$0xf]
    %v752 = vld [vmem:[%s736 + $0x3c] sm:$0xf]
    %v769 = vunpack.c.l.b16 %v737
    %v770 = vunpack.c.l.b16 %v738
    %v771 = vunpack.c.l.b16 %v739
    %v772 = vunpack.c.l.b16 %v740
    %v773 = vunpack.c.l.b16 %v741
    %v774 = vunpack.c.l.b16 %v742
    %v775 = vunpack.c.l.b16 %v743
    %v776 = vunpack.c.l.b16 %v744
    %v777 = vunpack.c.l.b16 %v745
    %v778 = vunpack.c.l.b16 %v746
    %v779 = vunpack.c.l.b16 %v747
    %v780 = vunpack.c.l.b16 %v748
    %v781 = vunpack.c.l.b16 %v749
    %v782 = vunpack.c.l.b16 %v750
    %v783 = vunpack.c.l.b16 %v751
    %v784 = vunpack.c.l.b16 %v752
    %v785 = vpack.c.b16 %v770, %v769
    %v786 = vpack.c.b16 %v772, %v771
    %v787 = vpack.c.b16 %v774, %v773
    %v788 = vpack.c.b16 %v776, %v775
    %v789 = vpack.c.b16 %v778, %v777
    %v790 = vpack.c.b16 %v780, %v779
    %v791 = vpack.c.b16 %v782, %v781
    %v792 = vpack.c.b16 %v784, %v783
    %801 = vmatpush.bf16.msra.mxu0 %v792
    %802 = vmatpush.bf16.msra.mxu0 %v791
    %803 = vmatpush.bf16.msra.mxu0 %v790
    %804 = vmatpush.bf16.msra.mxu0 %v789
    %805 = vmatpush.bf16.msra.mxu0 %v788
    %806 = vmatpush.bf16.msra.mxu0 %v787
    %807 = vmatpush.bf16.msra.mxu0 %v786
    %808 = vmatpush.bf16.msra.mxu0 %v785
    %809 = vmatmul.bf16.gmra.mxu0 %v735
    %v810 = vpop.f32.mrf.mxu0
    %v811 = vadd.f32 %v581, %v810
    %v812 = vpop.f32.mrf.mxu0
    %813 = vdwg.mxu0
    %814 = vst [vmem:[#allocation13] sm:$0xff] %v811
    // Predicated region
    $region62: #{tpu_custom_call.1} parent=1 // pred_check
      _
    $region63: #{tpu_custom_call.1} parent=1 // pred_check_branch
      %816 = sbr.rel (0) target = $region65
    $region64: #{tpu_custom_call.1} parent=1 // pred_region
      %818 = vsyncadd [#allocation4], 0
      %s820 = sshll.u32 [#allocation13], 4
      %s821 = int_to_ptr.vmem [resolvable:$true] %s820
      %s822 = sshll.u32 %s9, 4
      %s823 = int_to_ptr.hbm [resolvable:$true] %s822
      %825 = dma.vmem_to_hbm [thread:$0]  %s821, 128, %s823, [#allocation4]
    $region65: #{tpu_custom_call.1} parent=1 // pred_fallthru
      _
    // Predicated region
    $region66: #{tpu_custom_call.1} parent=1 // pred_check
      _
    $region67: #{tpu_custom_call.1} parent=1 // pred_check_branch
      %827 = sbr.rel (0) target = $region69
    $region68: #{tpu_custom_call.1} parent=1 // pred_region
      %829 = dma.done [#allocation4], 128
    $region69: #{tpu_custom_call.1} parent=1 // pred_fallthru
      _
    %830 = vsyncpa [#allocation3], 1
    %831 = vsyncpa [#allocation6], 1
    %832 = vsyncpa [#allocation9], 1
    %833 = vsyncpa [#allocation12], 1
    %834 = vsyncpa [#allocation4], 1

// kernel: tpu_custom_call.1
$region0: #{tpu_custom_call.1}
  #allocation0 [shape = 'u32[]', space=smem, size = 0x4, offset = 0x4, fixed_abs, tag = 'smem constant byte address 0x4 - core index']
  #allocation1 [shape = 'u32[72,128]{1,0:T(1,128)}', space=vmem, size = 0x9000, scoped, tag = 'internal scratch']
  %s0 = inlined_call_operand.vmem [shape: f32[8,6], index: 0, kind: input, shape index: {}]
  %s1 = inlined_call_operand.vmem [shape: f32[8,2], index: 1, kind: input, shape index: {}]
  %s2 = inlined_call_operand.hbm [shape: bf16[6,384], index: 2, kind: input, shape index: {}]
  %s3 = inlined_call_operand.hbm [shape: bf16[2,384], index: 3, kind: input, shape index: {}]
  %s4 = inlined_call_operand.hbm [shape: f32[1,384], index: 4, kind: input, shape index: {}]
  %s5 = inlined_call_operand.hbm [shape: bf16[128,128], index: 5, kind: input, shape index: {}]
  %s6 = inlined_call_operand.hbm [shape: bf16[2,128,256], index: 6, kind: input, shape index: {}]
  %s7 = inlined_call_operand.vmem [shape: f32[2,1,256], index: 7, kind: input, shape index: {}]
  %s8 = inlined_call_operand.hbm [shape: bf16[2,128,128], index: 8, kind: input, shape index: {}]
  %s9 = inlined_call_operand.hbm [shape: f32[8,128], index: 9, kind: output, shape index: {}]
  %s10 = sld [smem:[#allocation0]]
  $region70: #{tpu_custom_call.1} parent=0
    _
  %s12 = ssub.s32 1, %s10
  %s13 = scalar_select 0, %s12, %s10
  $region1: #{tpu_custom_call.1} parent=0
    #allocation2 [shape = 'u8[6144]{0}', space=vmem, size = 0x1800, scoped, tag = 'input window, operand 2, single buffered']
    #allocation3 [shape = 's32[1]{0}', space=sflag, size = 0x4, scoped, tag = 'scoped memory for tpu_custom_call.1']
    #allocation4 [shape = 's32[1]{0}', space=sflag, size = 0x4, scoped, tag = 'scoped memory for tpu_custom_call.1']
    #allocation5 [shape = 'u8[1536]{0}', space=vmem, size = 0x800, scoped, tag = 'input window, operand 3, single buffered']
    #allocation6 [shape = 's32[1]{0}', space=sflag, size = 0x4, scoped, tag = 'scoped memory for tpu_custom_call.1']
    #allocation7 [shape = 'u8[1536]{0}', space=vmem, size = 0x800, scoped, tag = 'input window, operand 4, single buffered']
    #allocation8 [shape = 'u8[32768]{0}', space=vmem, size = 0x8000, scoped, tag = 'input window, operand 5, single buffered']
    #allocation9 [shape = 's32[1]{0}', space=sflag, size = 0x4, scoped, tag = 'scoped memory for tpu_custom_call.1']
    #allocation10 [shape = 'u8[131072]{0}', space=vmem, size = 0x20000, scoped, tag = 'input window, operand 6, single buffered']
    #allocation11 [shape = 'u8[65536]{0}', space=vmem, size = 0x10000, scoped, tag = 'input window, operand 8, single buffered']
    #allocation12 [shape = 's32[1]{0}', space=sflag, size = 0x4, scoped, tag = 'scoped memory for tpu_custom_call.1']
    #allocation13 [shape = 'u8[4096]{0}', space=vmem, size = 0x1000, scoped, tag = 'output window, operand 0, single buffered']
    %14 = vsyncpa [#allocation3], 0
    %15 = vsyncpa [#allocation6], 0
    %16 = vsyncpa [#allocation9], 0
    %17 = vsyncpa [#allocation12], 0
    %18 = vsyncpa [#allocation4], 0
    // Predicated region
    $region2: #{tpu_custom_call.1} parent=1 // pred_check
      _
    $region3: #{tpu_custom_call.1} parent=1 // pred_check_branch
      %20 = sbr.rel (0) target = $region5
    $region4: #{tpu_custom_call.1} parent=1 // pred_region
      _
    $region5: #{tpu_custom_call.1} parent=1 // pred_fallthru
      _
    // Predicated region
    $region6: #{tpu_custom_call.1} parent=1 // pred_check
      _
    $region7: #{tpu_custom_call.1} parent=1 // pred_check_branch
      %22 = sbr.rel (0) target = $region9
    $region8: #{tpu_custom_call.1} parent=1 // pred_region
      _
    $region9: #{tpu_custom_call.1} parent=1 // pred_fallthru
      _
    // Predicated region
    $region10: #{tpu_custom_call.1} parent=1 // pred_check
      _
    $region11: #{tpu_custom_call.1} parent=1 // pred_check_branch
      %24 = sbr.rel (0) target = $region13
    $region12: #{tpu_custom_call.1} parent=1 // pred_region
      %26 = vsyncadd [#allocation3], 0
      %s28 = sshll.u32 %s2, 4
      %s29 = int_to_ptr.hbm [resolvable:$true] %s28
      %s30 = sshll.u32 [#allocation2], 4
      %s31 = int_to_ptr.vmem [resolvable:$true] %s30
      %33 = dma.hbm_to_vmem [thread:$0]  %s29, 192, %s31, [#allocation3]
    $region13: #{tpu_custom_call.1} parent=1 // pred_fallthru
      _
    // Predicated region
    $region14: #{tpu_custom_call.1} parent=1 // pred_check
      _
    $region15: #{tpu_custom_call.1} parent=1 // pred_check_branch
      %35 = sbr.rel (0) target = $region17
    $region16: #{tpu_custom_call.1} parent=1 // pred_region
      %37 = vsyncadd [#allocation6], 0
      %s39 = sshll.u32 %s3, 4
      %s40 = int_to_ptr.hbm [resolvable:$true] %s39
      %s41 = sshll.u32 [#allocation5], 4
      %s42 = int_to_ptr.vmem [resolvable:$true] %s41
      %44 = dma.hbm_to_vmem [thread:$0]  %s40, 48, %s42, [#allocation6]
    $region17: #{tpu_custom_call.1} parent=1 // pred_fallthru
      _
    // Predicated region
    $region18: #{tpu_custom_call.1} parent=1 // pred_check
      _
    $region19: #{tpu_custom_call.1} parent=1 // pred_check_branch
      %46 = sbr.rel (0) target = $region21
    $region20: #{tpu_custom_call.1} parent=1 // pred_region
      %48 = vsyncadd [#allocation6], 0
      %s50 = sshll.u32 %s4, 4
      %s51 = int_to_ptr.hbm [resolvable:$true] %s50
      %s52 = sshll.u32 [#allocation7], 4
      %s53 = int_to_ptr.vmem [resolvable:$true] %s52
      %55 = dma.hbm_to_vmem [thread:$0]  %s51, 48, %s53, [#allocation6]
    $region21: #{tpu_custom_call.1} parent=1 // pred_fallthru
      _
    // Predicated region
    $region22: #{tpu_custom_call.1} parent=1 // pred_check
      _
    $region23: #{tpu_custom_call.1} parent=1 // pred_check_branch
      %57 = sbr.rel (0) target = $region25
    $region24: #{tpu_custom_call.1} parent=1 // pred_region
      %59 = vsyncadd [#allocation9], 0
      %s60 = sshll.u32 %s5, 4
      %s61 = int_to_ptr.hbm [resolvable:$true] %s60
      %s62 = sshll.u32 [#allocation8], 4
      %s63 = int_to_ptr.vmem [resolvable:$true] %s62
      %68 = dma.hbm_to_vmem [thread:$0]  %s61, 1024, %s63, [#allocation9], 64, 64, 4
    $region25: #{tpu_custom_call.1} parent=1 // pred_fallthru
      _
    // Predicated region
    $region26: #{tpu_custom_call.1} parent=1 // pred_check
      _
    $region27: #{tpu_custom_call.1} parent=1 // pred_check_branch
      %70 = sbr.rel (0) target = $region29
    $region28: #{tpu_custom_call.1} parent=1 // pred_region
      %72 = vsyncadd [#allocation9], 0
      %s73 = sshll.u32 %s6, 4
      %s74 = int_to_ptr.hbm [resolvable:$true] %s73
      %s75 = sshll.u32 [#allocation10], 4
      %s76 = int_to_ptr.vmem [resolvable:$true] %s75
      %81 = dma.hbm_to_vmem [thread:$0]  %s74, 4096, %s76, [#allocation9], 128, 128, 8
    $region29: #{tpu_custom_call.1} parent=1 // pred_fallthru
      _
    // Predicated region
    $region30: #{tpu_custom_call.1} parent=1 // pred_check
      _
    $region31: #{tpu_custom_call.1} parent=1 // pred_check_branch
      %83 = sbr.rel (0) target = $region33
    $region32: #{tpu_custom_call.1} parent=1 // pred_region
      _
    $region33: #{tpu_custom_call.1} parent=1 // pred_fallthru
      _
    // Predicated region
    $region34: #{tpu_custom_call.1} parent=1 // pred_check
      _
    $region35: #{tpu_custom_call.1} parent=1 // pred_check_branch
      %85 = sbr.rel (0) target = $region37
    $region36: #{tpu_custom_call.1} parent=1 // pred_region
      %87 = vsyncadd [#allocation12], 0
      %s88 = sshll.u32 %s8, 4
      %s89 = int_to_ptr.hbm [resolvable:$true] %s88
      %s90 = sshll.u32 [#allocation11], 4
      %s91 = int_to_ptr.vmem [resolvable:$true] %s90
      %96 = dma.hbm_to_vmem [thread:$0]  %s89, 2048, %s91, [#allocation12], 64, 64, 4
    $region37: #{tpu_custom_call.1} parent=1 // pred_fallthru
      _
    // Predicated region
    $region38: #{tpu_custom_call.1} parent=1 // pred_check
      _
    $region39: #{tpu_custom_call.1} parent=1 // pred_check_branch
      %98 = sbr.rel (0) target = $region41
    $region40: #{tpu_custom_call.1} parent=1 // pred_region
      %100 = dma.done [#allocation3], 192
    $region41: #{tpu_custom_call.1} parent=1 // pred_fallthru
      _
    // Predicated region
    $region42: #{tpu_custom_call.1} parent=1 // pred_check
      _
    $region43: #{tpu_custom_call.1} parent=1 // pred_check_branch
      %102 = sbr.rel (0) target = $region45
    $region44: #{tpu_custom_call.1} parent=1 // pred_region
      %104 = dma.done [#allocation6], 48
    $region45: #{tpu_custom_call.1} parent=1 // pred_fallthru
      _
    // Predicated region
    $region46: #{tpu_custom_call.1} parent=1 // pred_check
      _
    $region47: #{tpu_custom_call.1} parent=1 // pred_check_branch
      %106 = sbr.rel (0) target = $region49
    $region48: #{tpu_custom_call.1} parent=1 // pred_region
      %108 = dma.done [#allocation6], 48
    $region49: #{tpu_custom_call.1} parent=1 // pred_fallthru
      _
    // Predicated region
    $region50: #{tpu_custom_call.1} parent=1 // pred_check
      _
    $region51: #{tpu_custom_call.1} parent=1 // pred_check_branch
      %110 = sbr.rel (0) target = $region53
    $region52: #{tpu_custom_call.1} parent=1 // pred_region
      %112 = dma.done [#allocation9], 1024
    $region53: #{tpu_custom_call.1} parent=1 // pred_fallthru
      _
    // Predicated region
    $region54: #{tpu_custom_call.1} parent=1 // pred_check
      _
    $region55: #{tpu_custom_call.1} parent=1 // pred_check_branch
      %114 = sbr.rel (0) target = $region57
    $region56: #{tpu_custom_call.1} parent=1 // pred_region
      %116 = dma.done [#allocation9], 4096
    $region57: #{tpu_custom_call.1} parent=1 // pred_fallthru
      _
    // Predicated region
    $region58: #{tpu_custom_call.1} parent=1 // pred_check
      _
    $region59: #{tpu_custom_call.1} parent=1 // pred_check_branch
      %118 = sbr.rel (0) target = $region61
    $region60: #{tpu_custom_call.1} parent=1 // pred_region
      %120 = dma.done [#allocation12], 2048
    $region61: #{tpu_custom_call.1} parent=1 // pred_fallthru
      _
    %v122 = vld [vmem:[#allocation7] sm:$0x7]
    %v123 = vld [vmem:[%s0] sm:$0xff]
    %v124 = vpack.c.bf16 %v123, %v123
    %v125 = vld [vmem:[#allocation2] sm:$0x77]
    %v126 = vld [vmem:[#allocation2 + $0x8] sm:$0x7]
    %v129 = vunpack.c.l.b16 %v125
    %v130 = vunpack.c.h.b16 %v125
    %v131 = vunpack.c.l.b16 %v126
    %v132 = vpack.c.b16 %v129, %v129
    %v133 = vpack.c.b16 %v130, %v130
    %v134 = vpack.c.b16 %v131, %v131
    %vm135 = vcmask 48128
    %v137 = vsel %vm135, %v124, 0
    %vm139 = vcmask 1042432
    %v141 = vsel %vm139, %v132, 0
    %v144 = vsel %vm139, %v133, 0
    %v147 = vsel %vm139, %v134, 0
    %149 = vmatpush.bf16.msra.mxu0 0
    %150 = vmatpush.bf16.msra.mxu0 0
    %151 = vmatpush.bf16.msra.mxu0 0
    %152 = vmatpush.bf16.msra.mxu0 0
    %153 = vmatpush.bf16.msra.mxu0 0
    %154 = vmatpush.bf16.msra.mxu0 0
    %155 = vmatpush.bf16.msra.mxu0 0
    %156 = vmatpush.bf16.msra.mxu0 %v141
    %157 = vmatmul.bf16.gmra.mxu0 %v137
    %v158 = vpop.f32.mrf.mxu0
    %v159 = vadd.f32 0.0, %v158
    %v160 = vpop.f32.mrf.mxu0
    %161 = vdwg.mxu0
    %162 = vmatpush.bf16.msra.mxu0 0
    %163 = vmatpush.bf16.msra.mxu0 0
    %164 = vmatpush.bf16.msra.mxu0 0
    %165 = vmatpush.bf16.msra.mxu0 0
    %166 = vmatpush.bf16.msra.mxu0 0
    %167 = vmatpush.bf16.msra.mxu0 0
    %168 = vmatpush.bf16.msra.mxu0 0
    %169 = vmatpush.bf16.msra.mxu0 %v144
    %170 = vmatmul.bf16.gmra.mxu0 %v137
    %v171 = vpop.f32.mrf.mxu0
    %v172 = vadd.f32 0.0, %v171
    %v173 = vpop.f32.mrf.mxu0
    %174 = vdwg.mxu0
    %175 = vmatpush.bf16.msra.mxu0 0
    %176 = vmatpush.bf16.msra.mxu0 0
    %177 = vmatpush.bf16.msra.mxu0 0
    %178 = vmatpush.bf16.msra.mxu0 0
    %179 = vmatpush.bf16.msra.mxu0 0
    %180 = vmatpush.bf16.msra.mxu0 0
    %181 = vmatpush.bf16.msra.mxu0 0
    %182 = vmatpush.bf16.msra.mxu0 %v147
    %183 = vmatmul.bf16.gmra.mxu0 %v137
    %v184 = vpop.f32.mrf.mxu0
    %v185 = vadd.f32 0.0, %v184
    %v186 = vpop.f32.mrf.mxu0
    %187 = vdwg.mxu0
    %v189 = vperm.slane %v122, 0
    %v190 = vperm.slane %v122, 1
    %v191 = vperm.slane %v122, 2
    %v195 = vadd.f32 %v189, %v159
    %v196 = vadd.f32 %v190, %v172
    %v197 = vadd.f32 %v191, %v185
    %v198 = vld [vmem:[%s1] sm:$0xff]
    %v199 = vpack.c.bf16 %v198, %v198
    %v200 = vld [vmem:[#allocation5] sm:$0x7]
    %202 = vst [vmem:[#allocation1] ss:$9 sm:$0xff] %v200
    %v203 = vld [vmem:[#allocation1] sm:$0xff]
    %v204 = vld [vmem:[#allocation1 + $0x9] sm:$0xff]
    %v205 = vld [vmem:[#allocation1 + $0x12] sm:$0xff]
    %vm206 = vcmask 15360
    %v208 = vsel %vm206, %v199, 0
    %vm210 = vcmask 1040384
    %v211 = vsel %vm210, %v203, 0
    %v213 = vsel %vm210, %v204, 0
    %v215 = vsel %vm210, %v205, 0
    %217 = vmatpush.bf16.msra.mxu0 0
    %218 = vmatpush.bf16.msra.mxu0 0
    %219 = vmatpush.bf16.msra.mxu0 0
    %220 = vmatpush.bf16.msra.mxu0 0
    %221 = vmatpush.bf16.msra.mxu0 0
    %222 = vmatpush.bf16.msra.mxu0 0
    %223 = vmatpush.bf16.msra.mxu0 0
    %224 = vmatpush.bf16.msra.mxu0 %v211
    %225 = vmatmul.bf16.gmra.mxu0 %v208
    %v226 = vpop.f32.mrf.mxu0
    %v227 = vadd.f32 0.0, %v226
    %v228 = vpop.f32.mrf.mxu0
    %229 = vdwg.mxu0
    %230 = vmatpush.bf16.msra.mxu0 0
    %231 = vmatpush.bf16.msra.mxu0 0
    %232 = vmatpush.bf16.msra.mxu0 0
    %233 = vmatpush.bf16.msra.mxu0 0
    %234 = vmatpush.bf16.msra.mxu0 0
    %235 = vmatpush.bf16.msra.mxu0 0
    %236 = vmatpush.bf16.msra.mxu0 0
    %237 = vmatpush.bf16.msra.mxu0 %v213
    %238 = vmatmul.bf16.gmra.mxu0 %v208
    %v239 = vpop.f32.mrf.mxu0
    %v240 = vadd.f32 0.0, %v239
    %v241 = vpop.f32.mrf.mxu0
    %242 = vdwg.mxu0
    %243 = vmatpush.bf16.msra.mxu0 0
    %244 = vmatpush.bf16.msra.mxu0 0
    %245 = vmatpush.bf16.msra.mxu0 0
    %246 = vmatpush.bf16.msra.mxu0 0
    %247 = vmatpush.bf16.msra.mxu0 0
    %248 = vmatpush.bf16.msra.mxu0 0
    %249 = vmatpush.bf16.msra.mxu0 0
    %250 = vmatpush.bf16.msra.mxu0 %v215
    %251 = vmatmul.bf16.gmra.mxu0 %v208
    %v252 = vpop.f32.mrf.mxu0
    %v253 = vadd.f32 0.0, %v252
    %v254 = vpop.f32.mrf.mxu0
    %255 = vdwg.mxu0
    %v256 = vadd.f32 %v195, %v227
    %v257 = vadd.f32 %v196, %v240
    %v258 = vadd.f32 %v197, %v253
    %v259 = vxor.u32 %v257, 2147483648
    %v260 = vmul.f32 %v259, 1.442695
    %v261 = vpow.pop %v260
    %v262 = vadd.f32 %v261, 1.0
    %v263 = vrcp.pop %v262
    %v264 = vmul.f32 %v262, %v263
    %v265 = vsub.f32 1.0, %v264
    %v266 = vmul.f32 %v263, %v265
    %v267 = vadd.f32 %v263, %v266
    %vm268 = vweird.f32 %v262
    %vm269 = vweird.f32 %v263
    %vm270 = vmor %vm268, %vm269
    %v271 = vsel %vm270, %v263, %v267
    %v272 = vand.u32 2147483647, %v262
    %vm273 = vcmp.eq.f32.partialorder %v272, 8.507059e+37
    %v274 = vand.u32 %v262, 2147483648
    %v275 = vor.u32 1.1754944e-38, %v274
    %v276 = vsel %vm273, %v275, %v271
    %v277 = vmul.f32 1.0, %v276
    %v278 = vmul.f32 %v256, %v277
    %v279 = vpack.c.bf16 %v278, %v278
    %v280 = vld [vmem:[#allocation8] sm:$0xf]
    %v281 = vld [vmem:[#allocation8 + $0x4] sm:$0xf]
    %v282 = vld [vmem:[#allocation8 + $0x8] sm:$0xf]
    %v283 = vld [vmem:[#allocation8 + $0xc] sm:$0xf]
    %v284 = vld [vmem:[#allocation8 + $0x10] sm:$0xf]
    %v285 = vld [vmem:[#allocation8 + $0x14] sm:$0xf]
    %v286 = vld [vmem:[#allocation8 + $0x18] sm:$0xf]
    %v287 = vld [vmem:[#allocation8 + $0x1c] sm:$0xf]
    %v288 = vld [vmem:[#allocation8 + $0x20] sm:$0xf]
    %v289 = vld [vmem:[#allocation8 + $0x24] sm:$0xf]
    %v290 = vld [vmem:[#allocation8 + $0x28] sm:$0xf]
    %v291 = vld [vmem:[#allocation8 + $0x2c] sm:$0xf]
    %v292 = vld [vmem:[#allocation8 + $0x30] sm:$0xf]
    %v293 = vld [vmem:[#allocation8 + $0x34] sm:$0xf]
    %v294 = vld [vmem:[#allocation8 + $0x38] sm:$0xf]
    %v295 = vld [vmem:[#allocation8 + $0x3c] sm:$0xf]
    %v312 = vunpack.c.l.b16 %v280
    %v313 = vunpack.c.l.b16 %v281
    %v314 = vunpack.c.l.b16 %v282
    %v315 = vunpack.c.l.b16 %v283
    %v316 = vunpack.c.l.b16 %v284
    %v317 = vunpack.c.l.b16 %v285
    %v318 = vunpack.c.l.b16 %v286
    %v319 = vunpack.c.l.b16 %v287
    %v320 = vunpack.c.l.b16 %v288
    %v321 = vunpack.c.l.b16 %v289
    %v322 = vunpack.c.l.b16 %v290
    %v323 = vunpack.c.l.b16 %v291
    %v324 = vunpack.c.l.b16 %v292
    %v325 = vunpack.c.l.b16 %v293
    %v326 = vunpack.c.l.b16 %v294
    %v327 = vunpack.c.l.b16 %v295
    %v328 = vpack.c.b16 %v313, %v312
    %v329 = vpack.c.b16 %v315, %v314
    %v330 = vpack.c.b16 %v317, %v316
    %v331 = vpack.c.b16 %v319, %v318
    %v332 = vpack.c.b16 %v321, %v320
    %v333 = vpack.c.b16 %v323, %v322
    %v334 = vpack.c.b16 %v325, %v324
    %v335 = vpack.c.b16 %v327, %v326
    %344 = vmatpush.bf16.msra.mxu0 %v335
    %345 = vmatpush.bf16.msra.mxu0 %v334
    %346 = vmatpush.bf16.msra.mxu0 %v333
    %347 = vmatpush.bf16.msra.mxu0 %v332
    %348 = vmatpush.bf16.msra.mxu0 %v331
    %349 = vmatpush.bf16.msra.mxu0 %v330
    %350 = vmatpush.bf16.msra.mxu0 %v329
    %351 = vmatpush.bf16.msra.mxu0 %v328
    %352 = vmatmul.bf16.gmra.mxu0 %v279
    %v353 = vpop.f32.mrf.mxu0
    %v354 = vadd.f32 %v258, %v353
    %v355 = vpop.f32.mrf.mxu0
    %356 = vdwg.mxu0
    %v357 = vpack.c.bf16 %v354, %v354
    %v358 = vld [vmem:[#allocation10] sm:$0xff]
    %v359 = vld [vmem:[#allocation10 + $0x8] sm:$0xff]
    %v360 = vld [vmem:[#allocation10 + $0x10] sm:$0xff]
    %v361 = vld [vmem:[#allocation10 + $0x18] sm:$0xff]
    %v362 = vld [vmem:[#allocation10 + $0x20] sm:$0xff]
    %v363 = vld [vmem:[#allocation10 + $0x28] sm:$0xff]
    %v364 = vld [vmem:[#allocation10 + $0x30] sm:$0xff]
    %v365 = vld [vmem:[#allocation10 + $0x38] sm:$0xff]
    %v366 = vld [vmem:[#allocation10 + $0x40] sm:$0xff]
    %v367 = vld [vmem:[#allocation10 + $0x48] sm:$0xff]
    %v368 = vld [vmem:[#allocation10 + $0x50] sm:$0xff]
    %v369 = vld [vmem:[#allocation10 + $0x58] sm:$0xff]
    %v370 = vld [vmem:[#allocation10 + $0x60] sm:$0xff]
    %v371 = vld [vmem:[#allocation10 + $0x68] sm:$0xff]
    %v372 = vld [vmem:[#allocation10 + $0x70] sm:$0xff]
    %v373 = vld [vmem:[#allocation10 + $0x78] sm:$0xff]
    %v374 = vld [vmem:[%s7] sm:$0x3]
    %v376 = vperm.slane %v374, 0
    %v377 = vperm.slane %v374, 1
    %v396 = vunpack.c.l.b16 %v358
    %v397 = vunpack.c.h.b16 %v358
    %v398 = vunpack.c.l.b16 %v359
    %v399 = vunpack.c.h.b16 %v359
    %v400 = vunpack.c.l.b16 %v360
    %v401 = vunpack.c.h.b16 %v360
    %v402 = vunpack.c.l.b16 %v361
    %v403 = vunpack.c.h.b16 %v361
    %v404 = vunpack.c.l.b16 %v362
    %v405 = vunpack.c.h.b16 %v362
    %v406 = vunpack.c.l.b16 %v363
    %v407 = vunpack.c.h.b16 %v363
    %v408 = vunpack.c.l.b16 %v364
    %v409 = vunpack.c.h.b16 %v364
    %v410 = vunpack.c.l.b16 %v365
    %v411 = vunpack.c.h.b16 %v365
    %v412 = vunpack.c.l.b16 %v366
    %v413 = vunpack.c.h.b16 %v366
    %v414 = vunpack.c.l.b16 %v367
    %v415 = vunpack.c.h.b16 %v367
    %v416 = vunpack.c.l.b16 %v368
    %v417 = vunpack.c.h.b16 %v368
    %v418 = vunpack.c.l.b16 %v369
    %v419 = vunpack.c.h.b16 %v369
    %v420 = vunpack.c.l.b16 %v370
    %v421 = vunpack.c.h.b16 %v370
    %v422 = vunpack.c.l.b16 %v371
    %v423 = vunpack.c.h.b16 %v371
    %v424 = vunpack.c.l.b16 %v372
    %v425 = vunpack.c.h.b16 %v372
    %v426 = vunpack.c.l.b16 %v373
    %v427 = vunpack.c.h.b16 %v373
    %v428 = vpack.c.b16 %v398, %v396
    %v429 = vpack.c.b16 %v399, %v397
    %v430 = vpack.c.b16 %v402, %v400
    %v431 = vpack.c.b16 %v403, %v401
    %v432 = vpack.c.b16 %v406, %v404
    %v433 = vpack.c.b16 %v407, %v405
    %v434 = vpack.c.b16 %v410, %v408
    %v435 = vpack.c.b16 %v411, %v409
    %v436 = vpack.c.b16 %v414, %v412
    %v437 = vpack.c.b16 %v415, %v413
    %v438 = vpack.c.b16 %v418, %v416
    %v439 = vpack.c.b16 %v419, %v417
    %v440 = vpack.c.b16 %v422, %v420
    %v441 = vpack.c.b16 %v423, %v421
    %v442 = vpack.c.b16 %v426, %v424
    %v443 = vpack.c.b16 %v427, %v425
    %460 = vmatpush.bf16.msra.mxu0 %v442
    %461 = vmatpush.bf16.msra.mxu0 %v440
    %462 = vmatpush.bf16.msra.mxu0 %v438
    %463 = vmatpush.bf16.msra.mxu0 %v436
    %464 = vmatpush.bf16.msra.mxu0 %v434
    %465 = vmatpush.bf16.msra.mxu0 %v432
    %466 = vmatpush.bf16.msra.mxu0 %v430
    %467 = vmatpush.bf16.msra.mxu0 %v428
    %468 = vmatmul.bf16.gmra.mxu0 %v357
    %v469 = vpop.f32.mrf.mxu0
    %v470 = vadd.f32 %v376, %v469
    %v471 = vpop.f32.mrf.mxu0
    %472 = vdwg.mxu0
    %473 = vmatpush.bf16.msra.mxu0 %v443
    %474 = vmatpush.bf16.msra.mxu0 %v441
    %475 = vmatpush.bf16.msra.mxu0 %v439
    %476 = vmatpush.bf16.msra.mxu0 %v437
    %477 = vmatpush.bf16.msra.mxu0 %v435
    %478 = vmatpush.bf16.msra.mxu0 %v433
    %479 = vmatpush.bf16.msra.mxu0 %v431
    %480 = vmatpush.bf16.msra.mxu0 %v429
    %481 = vmatmul.bf16.gmra.mxu0 %v357
    %v482 = vpop.f32.mrf.mxu0
    %v483 = vadd.f32 %v377, %v482
    %v484 = vpop.f32.mrf.mxu0
    %485 = vdwg.mxu0
    %v486 = vxor.u32 %v483, 2147483648
    %v487 = vmul.f32 %v486, 1.442695
    %v488 = vpow.pop %v487
    %v489 = vadd.f32 %v488, 1.0
    %v490 = vrcp.pop %v489
    %v491 = vmul.f32 %v489, %v490
    %v492 = vsub.f32 1.0, %v491
    %v493 = vmul.f32 %v490, %v492
    %v494 = vadd.f32 %v490, %v493
    %vm495 = vweird.f32 %v489
    %vm496 = vweird.f32 %v490
    %vm497 = vmor %vm495, %vm496
    %v498 = vsel %vm497, %v490, %v494
    %v499 = vand.u32 2147483647, %v489
    %vm500 = vcmp.eq.f32.partialorder %v499, 8.507059e+37
    %v501 = vand.u32 %v489, 2147483648
    %v502 = vor.u32 1.1754944e-38, %v501
    %v503 = vsel %vm500, %v502, %v498
    %v504 = vmul.f32 1.0, %v503
    %v505 = vmul.f32 %v470, %v504
    %v506 = vpack.c.bf16 %v505, %v505
    %v507 = vld [vmem:[#allocation11] sm:$0xf]
    %v508 = vld [vmem:[#allocation11 + $0x4] sm:$0xf]
    %v509 = vld [vmem:[#allocation11 + $0x8] sm:$0xf]
    %v510 = vld [vmem:[#allocation11 + $0xc] sm:$0xf]
    %v511 = vld [vmem:[#allocation11 + $0x10] sm:$0xf]
    %v512 = vld [vmem:[#allocation11 + $0x14] sm:$0xf]
    %v513 = vld [vmem:[#allocation11 + $0x18] sm:$0xf]
    %v514 = vld [vmem:[#allocation11 + $0x1c] sm:$0xf]
    %v515 = vld [vmem:[#allocation11 + $0x20] sm:$0xf]
    %v516 = vld [vmem:[#allocation11 + $0x24] sm:$0xf]
    %v517 = vld [vmem:[#allocation11 + $0x28] sm:$0xf]
    %v518 = vld [vmem:[#allocation11 + $0x2c] sm:$0xf]
    %v519 = vld [vmem:[#allocation11 + $0x30] sm:$0xf]
    %v520 = vld [vmem:[#allocation11 + $0x34] sm:$0xf]
    %v521 = vld [vmem:[#allocation11 + $0x38] sm:$0xf]
    %v522 = vld [vmem:[#allocation11 + $0x3c] sm:$0xf]
    %v539 = vunpack.c.l.b16 %v507
    %v540 = vunpack.c.l.b16 %v508
    %v541 = vunpack.c.l.b16 %v509
    %v542 = vunpack.c.l.b16 %v510
    %v543 = vunpack.c.l.b16 %v511
    %v544 = vunpack.c.l.b16 %v512
    %v545 = vunpack.c.l.b16 %v513
    %v546 = vunpack.c.l.b16 %v514
    %v547 = vunpack.c.l.b16 %v515
    %v548 = vunpack.c.l.b16 %v516
    %v549 = vunpack.c.l.b16 %v517
    %v550 = vunpack.c.l.b16 %v518
    %v551 = vunpack.c.l.b16 %v519
    %v552 = vunpack.c.l.b16 %v520
    %v553 = vunpack.c.l.b16 %v521
    %v554 = vunpack.c.l.b16 %v522
    %v555 = vpack.c.b16 %v540, %v539
    %v556 = vpack.c.b16 %v542, %v541
    %v557 = vpack.c.b16 %v544, %v543
    %v558 = vpack.c.b16 %v546, %v545
    %v559 = vpack.c.b16 %v548, %v547
    %v560 = vpack.c.b16 %v550, %v549
    %v561 = vpack.c.b16 %v552, %v551
    %v562 = vpack.c.b16 %v554, %v553
    %571 = vmatpush.bf16.msra.mxu0 %v562
    %572 = vmatpush.bf16.msra.mxu0 %v561
    %573 = vmatpush.bf16.msra.mxu0 %v560
    %574 = vmatpush.bf16.msra.mxu0 %v559
    %575 = vmatpush.bf16.msra.mxu0 %v558
    %576 = vmatpush.bf16.msra.mxu0 %v557
    %577 = vmatpush.bf16.msra.mxu0 %v556
    %578 = vmatpush.bf16.msra.mxu0 %v555
    %579 = vmatmul.bf16.gmra.mxu0 %v506
    %v580 = vpop.f32.mrf.mxu0
    %v581 = vadd.f32 %v354, %v580
    %v582 = vpop.f32.mrf.mxu0
    %583 = vdwg.mxu0
    %v584 = vpack.c.bf16 %v581, %v581
    %s585 = scalar_lea.vmem [#allocation10], 128
    %v586 = vld [vmem:[%s585] sm:$0xff]
    %v587 = vld [vmem:[%s585 + $0x8] sm:$0xff]
    %v588 = vld [vmem:[%s585 + $0x10] sm:$0xff]
    %v589 = vld [vmem:[%s585 + $0x18] sm:$0xff]
    %v590 = vld [vmem:[%s585 + $0x20] sm:$0xff]
    %v591 = vld [vmem:[%s585 + $0x28] sm:$0xff]
    %v592 = vld [vmem:[%s585 + $0x30] sm:$0xff]
    %v593 = vld [vmem:[%s585 + $0x38] sm:$0xff]
    %v594 = vld [vmem:[%s585 + $0x40] sm:$0xff]
    %v595 = vld [vmem:[%s585 + $0x48] sm:$0xff]
    %v596 = vld [vmem:[%s585 + $0x50] sm:$0xff]
    %v597 = vld [vmem:[%s585 + $0x58] sm:$0xff]
    %v598 = vld [vmem:[%s585 + $0x60] sm:$0xff]
    %v599 = vld [vmem:[%s585 + $0x68] sm:$0xff]
    %v600 = vld [vmem:[%s585 + $0x70] sm:$0xff]
    %v601 = vld [vmem:[%s585 + $0x78] sm:$0xff]
    %s602 = scalar_lea.vmem %s7, 2
    %v603 = vld [vmem:[%s602] sm:$0x3]
    %v605 = vperm.slane %v603, 0
    %v606 = vperm.slane %v603, 1
    %v625 = vunpack.c.l.b16 %v586
    %v626 = vunpack.c.h.b16 %v586
    %v627 = vunpack.c.l.b16 %v587
    %v628 = vunpack.c.h.b16 %v587
    %v629 = vunpack.c.l.b16 %v588
    %v630 = vunpack.c.h.b16 %v588
    %v631 = vunpack.c.l.b16 %v589
    %v632 = vunpack.c.h.b16 %v589
    %v633 = vunpack.c.l.b16 %v590
    %v634 = vunpack.c.h.b16 %v590
    %v635 = vunpack.c.l.b16 %v591
    %v636 = vunpack.c.h.b16 %v591
    %v637 = vunpack.c.l.b16 %v592
    %v638 = vunpack.c.h.b16 %v592
    %v639 = vunpack.c.l.b16 %v593
    %v640 = vunpack.c.h.b16 %v593
    %v641 = vunpack.c.l.b16 %v594
    %v642 = vunpack.c.h.b16 %v594
    %v643 = vunpack.c.l.b16 %v595
    %v644 = vunpack.c.h.b16 %v595
    %v645 = vunpack.c.l.b16 %v596
    %v646 = vunpack.c.h.b16 %v596
    %v647 = vunpack.c.l.b16 %v597
    %v648 = vunpack.c.h.b16 %v597
    %v649 = vunpack.c.l.b16 %v598
    %v650 = vunpack.c.h.b16 %v598
    %v651 = vunpack.c.l.b16 %v599
    %v652 = vunpack.c.h.b16 %v599
    %v653 = vunpack.c.l.b16 %v600
    %v654 = vunpack.c.h.b16 %v600
    %v655 = vunpack.c.l.b16 %v601
    %v656 = vunpack.c.h.b16 %v601
    %v657 = vpack.c.b16 %v627, %v625
    %v658 = vpack.c.b16 %v628, %v626
    %v659 = vpack.c.b16 %v631, %v629
    %v660 = vpack.c.b16 %v632, %v630
    %v661 = vpack.c.b16 %v635, %v633
    %v662 = vpack.c.b16 %v636, %v634
    %v663 = vpack.c.b16 %v639, %v637
    %v664 = vpack.c.b16 %v640, %v638
    %v665 = vpack.c.b16 %v643, %v641
    %v666 = vpack.c.b16 %v644, %v642
    %v667 = vpack.c.b16 %v647, %v645
    %v668 = vpack.c.b16 %v648, %v646
    %v669 = vpack.c.b16 %v651, %v649
    %v670 = vpack.c.b16 %v652, %v650
    %v671 = vpack.c.b16 %v655, %v653
    %v672 = vpack.c.b16 %v656, %v654
    %689 = vmatpush.bf16.msra.mxu0 %v671
    %690 = vmatpush.bf16.msra.mxu0 %v669
    %691 = vmatpush.bf16.msra.mxu0 %v667
    %692 = vmatpush.bf16.msra.mxu0 %v665
    %693 = vmatpush.bf16.msra.mxu0 %v663
    %694 = vmatpush.bf16.msra.mxu0 %v661
    %695 = vmatpush.bf16.msra.mxu0 %v659
    %696 = vmatpush.bf16.msra.mxu0 %v657
    %697 = vmatmul.bf16.gmra.mxu0 %v584
    %v698 = vpop.f32.mrf.mxu0
    %v699 = vadd.f32 %v605, %v698
    %v700 = vpop.f32.mrf.mxu0
    %701 = vdwg.mxu0
    %702 = vmatpush.bf16.msra.mxu0 %v672
    %703 = vmatpush.bf16.msra.mxu0 %v670
    %704 = vmatpush.bf16.msra.mxu0 %v668
    %705 = vmatpush.bf16.msra.mxu0 %v666
    %706 = vmatpush.bf16.msra.mxu0 %v664
    %707 = vmatpush.bf16.msra.mxu0 %v662
    %708 = vmatpush.bf16.msra.mxu0 %v660
    %709 = vmatpush.bf16.msra.mxu0 %v658
    %710 = vmatmul.bf16.gmra.mxu0 %v584
    %v711 = vpop.f32.mrf.mxu0
    %v712 = vadd.f32 %v606, %v711
    %v713 = vpop.f32.mrf.mxu0
    %714 = vdwg.mxu0
    %v715 = vxor.u32 %v712, 2147483648
    %v716 = vmul.f32 %v715, 1.442695
    %v717 = vpow.pop %v716
    %v718 = vadd.f32 %v717, 1.0
    %v719 = vrcp.pop %v718
    %v720 = vmul.f32 %v718, %v719
    %v721 = vsub.f32 1.0, %v720
    %v722 = vmul.f32 %v719, %v721
    %v723 = vadd.f32 %v719, %v722
    %vm724 = vweird.f32 %v718
    %vm725 = vweird.f32 %v719
    %vm726 = vmor %vm724, %vm725
    %v727 = vsel %vm726, %v719, %v723
    %v728 = vand.u32 2147483647, %v718
    %vm729 = vcmp.eq.f32.partialorder %v728, 8.507059e+37
    %v730 = vand.u32 %v718, 2147483648
    %v731 = vor.u32 1.1754944e-38, %v730
    %v732 = vsel %vm729, %v731, %v727
    %v733 = vmul.f32 1.0, %v732
    %v734 = vmul.f32 %v699, %v733
    %v735 = vpack.c.bf16 %v734, %v734
    %s736 = scalar_lea.vmem [#allocation11], 64
    %v737 = vld [vmem:[%s736] sm:$0xf]
    %v738 = vld [vmem:[%s736 + $0x4] sm:$0xf]
    %v739 = vld [vmem:[%s736 + $0x8] sm:$0xf]
    %v740 = vld [vmem:[%s736 + $0xc] sm:$0xf]
    %v741 = vld [vmem:[%s736 + $0x10] sm:$0xf]
    %v742 = vld [vmem:[%s736 + $0x14] sm:$0xf]
    %v743 = vld [vmem:[%s736 + $0x18] sm:$0xf]
    %v744 = vld [vmem:[%s736 + $0x1c] sm:$0xf]
    %v745 = vld [vmem:[%s736 + $0x20] sm:$0xf]
    %v746 = vld [vmem:[%s736 + $0x24] sm:$0xf]
    %v747 = vld [vmem:[%s736 + $0x28] sm:$0xf]
    %v748 = vld [vmem:[%s736 + $0x2c] sm:$0xf]
    %v749 = vld [vmem:[%s736 + $0x30] sm:$0xf]
    %v750 = vld [vmem:[%s736 + $0x34] sm:$0xf]
    %v751 = vld [vmem:[%s736 + $0x38] sm:$0xf]
    %v752 = vld [vmem:[%s736 + $0x3c] sm:$0xf]
    %v769 = vunpack.c.l.b16 %v737
    %v770 = vunpack.c.l.b16 %v738
    %v771 = vunpack.c.l.b16 %v739
    %v772 = vunpack.c.l.b16 %v740
    %v773 = vunpack.c.l.b16 %v741
    %v774 = vunpack.c.l.b16 %v742
    %v775 = vunpack.c.l.b16 %v743
    %v776 = vunpack.c.l.b16 %v744
    %v777 = vunpack.c.l.b16 %v745
    %v778 = vunpack.c.l.b16 %v746
    %v779 = vunpack.c.l.b16 %v747
    %v780 = vunpack.c.l.b16 %v748
    %v781 = vunpack.c.l.b16 %v749
    %v782 = vunpack.c.l.b16 %v750
    %v783 = vunpack.c.l.b16 %v751
    %v784 = vunpack.c.l.b16 %v752
    %v785 = vpack.c.b16 %v770, %v769
    %v786 = vpack.c.b16 %v772, %v771
    %v787 = vpack.c.b16 %v774, %v773
    %v788 = vpack.c.b16 %v776, %v775
    %v789 = vpack.c.b16 %v778, %v777
    %v790 = vpack.c.b16 %v780, %v779
    %v791 = vpack.c.b16 %v782, %v781
    %v792 = vpack.c.b16 %v784, %v783
    %801 = vmatpush.bf16.msra.mxu0 %v792
    %802 = vmatpush.bf16.msra.mxu0 %v791
    %803 = vmatpush.bf16.msra.mxu0 %v790
    %804 = vmatpush.bf16.msra.mxu0 %v789
    %805 = vmatpush.bf16.msra.mxu0 %v788
    %806 = vmatpush.bf16.msra.mxu0 %v787
    %807 = vmatpush.bf16.msra.mxu0 %v786
    %808 = vmatpush.bf16.msra.mxu0 %v785
    %809 = vmatmul.bf16.gmra.mxu0 %v735
    %v810 = vpop.f32.mrf.mxu0
    %v811 = vadd.f32 %v581, %v810
    %v812 = vpop.f32.mrf.mxu0
    %813 = vdwg.mxu0
    %814 = vst [vmem:[#allocation13] sm:$0xff] %v811
    // Predicated region
    $region62: #{tpu_custom_call.1} parent=1 // pred_check
      _
    $region63: #{tpu_custom_call.1} parent=1 // pred_check_branch
      %816 = sbr.rel (0) target = $region65
    $region64: #{tpu_custom_call.1} parent=1 // pred_region
      %818 = vsyncadd [#allocation4], 0
      %s820 = sshll.u32 [#allocation13], 4
      %s821 = int_to_ptr.vmem [resolvable:$true] %s820
      %s822 = sshll.u32 %s9, 4
      %s823 = int_to_ptr.hbm [resolvable:$true] %s822
      %825 = dma.vmem_to_hbm [thread:$0]  %s821, 128, %s823, [#allocation4]
    $region65: #{tpu_custom_call.1} parent=1 // pred_fallthru
      _
    // Predicated region
    $region66: #{tpu_custom_call.1} parent=1 // pred_check
      _
    $region67: #{tpu_custom_call.1} parent=1 // pred_check_branch
      %827 = sbr.rel (0) target = $region69
    $region68: #{tpu_custom_call.1} parent=1 // pred_region
      %829 = dma.done [#allocation4], 128
    $region69: #{tpu_custom_call.1} parent=1 // pred_fallthru
      _
    %830 = vsyncpa [#allocation3], 1
    %831 = vsyncpa [#allocation6], 1
    %832 = vsyncpa [#allocation9], 1
    %833 = vsyncpa [#allocation12], 1
    %834 = vsyncpa [#allocation4], 1

</llo_original>
